<compile_context>
chip_gen: v6e
topology: v6e:2x2x1
jax: 0.10.0
libtpu: 0.0.40
codegen_flags: <defaults>
</compile_context>

<pallas_src>
import functools
import math

import jax
import jax.numpy as jnp
from jax.experimental import pallas as pl
from jax.experimental.pallas import tpu as pltpu

F32 = jnp.float32
BF16 = jnp.bfloat16


def _layernorm(z, g, b, eps=1e-5):
    mu = jnp.mean(z, axis=-1, keepdims=True)
    var = jnp.mean((z - mu) ** 2, axis=-1, keepdims=True)
    return (z - mu) * jax.lax.rsqrt(var + eps) * g + b


# ----------------------------------------------------------------------------
# Kernel A: attention + LayerNorms + FFN for the whole batch in one invocation.
# ----------------------------------------------------------------------------
def _attn_ffn_kernel(*refs, B, T, num_heads, mem_slots):
    has_mem = mem_slots > 0
    if has_mem:
        (x_ref, mem_ref,
         wq_ref, wk_ref, wv_ref, bq_ref, bk_ref, bv_ref,
         wo_ref, bo_ref, g1_ref, be1_ref,
         w1_ref, b1_ref, w2_ref, b2_ref, g2_ref, be2_ref,
         out_ref, usage_ref) = refs
    else:
        (x_ref,
         wq_ref, wk_ref, wv_ref, bq_ref, bk_ref, bv_ref,
         wo_ref, bo_ref, g1_ref, be1_ref,
         w1_ref, b1_ref, w2_ref, b2_ref, g2_ref, be2_ref,
         out_ref) = refs
        mem_ref = None
        usage_ref = None

    x32 = x_ref[...]                     # [B*T, E] f32 (residual stream)
    x16 = x32.astype(BF16)
    BT, E = x32.shape
    H = num_heads
    hd = E // H
    scale = 1.0 / math.sqrt(hd)

    # --- QKV projections over the flattened batch: M = B*T rows on the MXU ---
    q = jnp.dot(x16, wq_ref[...], preferred_element_type=F32) + bq_ref[...]
    q = q * scale                        # fold 1/sqrt(hd) into Q once
    k_x = jnp.dot(x16, wk_ref[...], preferred_element_type=F32) + bk_ref[...]
    v_x = jnp.dot(x16, wv_ref[...], preferred_element_type=F32) + bv_ref[...]

    def to_heads(z):                     # [B*T, E] -> [H*B, T, hd] (3-D transposes only)
        zh = jnp.transpose(z.reshape(BT, H, hd), (1, 0, 2))     # [H, B*T, hd]
        return zh.reshape(H * B, T, hd)

    qh = to_heads(q).astype(BF16)
    kxh = to_heads(k_x).astype(BF16)
    vxh = to_heads(v_x).astype(BF16)

    if has_mem:
        # Batch-invariant memory K/V projection, computed exactly once per call.
        m16 = mem_ref[...]                                      # [M, E] bf16
        k_m = jnp.dot(m16, wk_ref[...], preferred_element_type=F32) + bk_ref[...]
        v_m = jnp.dot(m16, wv_ref[...], preferred_element_type=F32) + bv_ref[...]

        def mem_heads(z):                # [M, E] -> [H*B, M, hd] (replicated over batch)
            zh = jnp.transpose(z.reshape(mem_slots, H, hd), (1, 0, 2))  # [H, M, hd]
            zb = jnp.broadcast_to(zh[:, None], (H, B, mem_slots, hd))
            return zb.reshape(H * B, mem_slots, hd)

        kh = jnp.concatenate([mem_heads(k_m).astype(BF16), kxh], axis=1)
        vh = jnp.concatenate([mem_heads(v_m).astype(BF16), vxh], axis=1)
    else:
        kh, vh = kxh, vxh

    S = mem_slots + T

    # --- attention: 3-D batched matmuls over the merged (H*B) batch dim ---
    s = jnp.einsum('bqd,bkd->bqk', qh, kh,
                   preferred_element_type=F32)                  # [H*B, T, S]
    s_max = jnp.max(s, axis=-1, keepdims=True)
    expo = jnp.exp(s - s_max)
    denom = jnp.sum(expo, axis=-1, keepdims=True)
    p = expo * pl.reciprocal(denom, approx=True)                # [H*B, T, S]

    if has_mem:
        # usage_delta = sum over heads & queries of batch element 0's attention
        # mass over the memory slots (matches attn_w[0][:, :, :prev_slots]).
        p4 = p.reshape(H, B, T, S)
        usage = jnp.sum(p4[:, 0, :, :mem_slots], axis=(0, 1))   # [M]
        usage_ref[...] = usage.reshape(1, mem_slots)

    ctx = jnp.einsum('bqk,bkd->bqd', p.astype(BF16), vh,
                     preferred_element_type=F32)                # [H*B, T, hd]

    # --- head concat + single (B*T,E)x(E,E) out-projection (K = E) ---
    ctx_c = jnp.transpose(ctx.reshape(H, BT, hd), (1, 0, 2)).reshape(BT, E)
    attn = jnp.dot(ctx_c.astype(BF16), wo_ref[...],
                   preferred_element_type=F32) + bo_ref[...]    # [B*T, E]

    # --- residual + LayerNorm (eps=1e-5), f32 math ---
    x2 = _layernorm(x32 + attn, g1_ref[...], be1_ref[...])

    # --- feed-forward: Linear -> ReLU -> Linear (bf16 MXU, f32 acc) ---
    h1 = jnp.dot(x2.astype(BF16), w1_ref[...], preferred_element_type=F32) + b1_ref[...]
    h1 = jnp.maximum(h1, 0.0)
    ffo = jnp.dot(h1.astype(BF16), w2_ref[...], preferred_element_type=F32) + b2_ref[...]
    out = _layernorm(x2 + ffo, g2_ref[...], be2_ref[...])

    out_ref[...] = out.astype(out_ref.dtype)


# ----------------------------------------------------------------------------
# Kernel B: vocab projection, (B*T, E) resident, weight streamed in lane-dense
# tiles, exact-shape (masked last tile) logits output.
# ----------------------------------------------------------------------------
def _vocab_kernel(x_ref, wout_ref, bout_ref, logits_ref):
    logits_ref[...] = (jnp.dot(x_ref[...], wout_ref[...],
                               preferred_element_type=F32) + bout_ref[...])


# ----------------------------------------------------------------------------
# Wrapper: full UsageTransformerXLModel.forward
# ----------------------------------------------------------------------------
def usage_transformer_xl_forward(params, tokens, mem_x, mem_usage,
                                 *, num_heads, mem_size):
    B, T = tokens.shape
    E = params['embed'].shape[1]
    emb_flat = jnp.take(params['embed'], tokens.reshape(-1), axis=0).astype(F32)  # [B*T, E]
    has_mem = mem_x is not None
    prev_slots = mem_x.shape[0] if has_mem else 0

    weight_names = ('wq_t', 'wk_t', 'wv_t', 'bq', 'bk', 'bv',
                    'wo_t', 'bo', 'g1', 'be1',
                    'w1_t', 'b1', 'w2_t', 'b2', 'g2', 'be2')
    weights = [params[n] for n in weight_names]

    inputs = [emb_flat]
    if has_mem:
        inputs.append(mem_x.astype(BF16))   # only ever an MXU operand
    inputs += weights

    kernel_a = functools.partial(_attn_ffn_kernel, B=B, T=T,
                                 num_heads=num_heads, mem_slots=prev_slots)
    out_sds = jax.ShapeDtypeStruct((B * T, E), BF16)
    if has_mem:
        usage_sds = jax.ShapeDtypeStruct((1, prev_slots), F32)
        out_flat, usage = pl.pallas_call(
            kernel_a, out_shape=(out_sds, usage_sds))(*inputs)
    else:
        out_flat = pl.pallas_call(kernel_a, out_shape=out_sds)(*inputs)
        usage = None

    # --- vocab projection: x stays resident, W_out streamed in lane-dense tiles ---
    V = params['wout_t'].shape[1]
    tv_target = 512
    if V > tv_target:
        V_pad = -(-V // tv_target) * tv_target
        tv = tv_target
    else:
        V_pad = -(-V // 128) * 128
        tv = V_pad
    NV = V_pad // tv

    wout = params['wout_t']
    bout = params['bout']
    if V_pad != V:
        wout = jnp.pad(wout, ((0, 0), (0, V_pad - V)))
        bout = jnp.pad(bout, ((0, 0), (0, V_pad - V)))

    logits_flat = pl.pallas_call(
        _vocab_kernel,
        out_shape=jax.ShapeDtypeStruct((B * T, V), F32),
        grid=(NV,),
        in_specs=[
            pl.BlockSpec((B * T, E), lambda j: (0, 0)),
            pl.BlockSpec((E, tv), lambda j: (0, j)),
            pl.BlockSpec((1, tv), lambda j: (0, j)),
        ],
        # Last tile is boundary-masked -> no post-kernel logits slice needed.
        out_specs=pl.BlockSpec((B * T, tv), lambda j: (0, j)),
        compiler_params=pltpu.CompilerParams(
            dimension_semantics=("parallel",)),
    )(out_flat, wout, bout)
    logits = logits_flat.reshape(B, T, V)

    # --- usage-aware memory update (batch element 0, "detached"), plain JAX ---
    x_det = emb_flat[:T]                                         # [T, E] (batch 0)
    if not has_mem:
        mem_x_new = x_det
        mem_usage_new = jnp.zeros((T,), F32)
        ratio = 1.0
    else:
        usage_delta = usage[0]                                   # [prev_slots]
        new_usage_existing = mem_usage + usage_delta
        mem_x_concat = jnp.concatenate([mem_x, x_det], axis=0)
        usage_concat = jnp.concatenate(
            [new_usage_existing, jnp.zeros((T,), F32)], axis=0)
        mem_concat_size = mem_x_concat.shape[0]
        if mem_concat_size > mem_size:
            vals, idx = jax.lax.top_k(usage_concat, mem_size)
            mem_x_new = mem_x_concat[idx]
            mem_usage_new = vals
            ratio = float(mem_size) / float(mem_concat_size)
        else:
            mem_x_new = mem_x_concat
            mem_usage_new = usage_concat
            ratio = 1.0

    return logits, mem_x_new, mem_usage_new, ratio


# ----------------------------------------------------------------------------
# Deterministic parameter construction (matches nn.Module shapes).
# ----------------------------------------------------------------------------
def make_params(key, vocab_size, embed_dim, num_heads, ffn_mult=4):
    E, V = embed_dim, vocab_size
    ks = jax.random.split(key, 10)
    n = lambda k, shape, s=0.05: (s * jax.random.normal(k, shape)).astype(F32)
    # nn.MultiheadAttention: in_proj_weight [3E, E] split into q/k/v (stored
    # transposed so the kernel does x @ W^T); out_proj stored as plain W_o^T.
    in_proj_w = n(ks[0], (3 * E, E))
    in_proj_b = n(ks[1], (3 * E,))
    wo = n(ks[3], (E, E))
    return {
        'embed':  n(ks[2], (V, E), 1.0),
        'wq_t':   in_proj_w[:E].T.astype(BF16),
        'wk_t':   in_proj_w[E:2 * E].T.astype(BF16),
        'wv_t':   in_proj_w[2 * E:].T.astype(BF16),
        'bq':     in_proj_b[:E].reshape(1, E),
        'bk':     in_proj_b[E:2 * E].reshape(1, E),
        'bv':     in_proj_b[2 * E:].reshape(1, E),
        'wo_t':   wo.T.astype(BF16),                              # plain [E, E]
        'bo':     n(ks[4], (E,)).reshape(1, E),
        'g1':     jnp.ones((1, E), F32),
        'be1':    jnp.zeros((1, E), F32),
        'w1_t':   n(ks[5], (ffn_mult * E, E)).T.astype(BF16),     # (E, 4E)
        'b1':     n(ks[6], (ffn_mult * E,)).reshape(1, ffn_mult * E),
        'w2_t':   n(ks[7], (E, ffn_mult * E)).T.astype(BF16),     # (4E, E)
        'b2':     n(ks[8], (E,)).reshape(1, E),
        'g2':     jnp.ones((1, E), F32),
        'be2':    jnp.zeros((1, E), F32),
        'wout_t': n(ks[9], (V, E)).T.astype(BF16),                # (E, V)
        'bout':   jnp.zeros((1, V), F32),
    }


if __name__ == "__main__":
    vocab_size, embed_dim, num_heads, mem_size = 50, 32, 4, 12
    B, T = 2, 8

    key = jax.random.PRNGKey(0)
    kp, kt1, kt2 = jax.random.split(key, 3)
    params = make_params(kp, vocab_size, embed_dim, num_heads)

    tokens1 = jax.random.randint(kt1, (B, T), 0, vocab_size, dtype=jnp.int32)
    tokens2 = jax.random.randint(kt2, (B, T), 0, vocab_size, dtype=jnp.int32)

    # Step 1: no memory yet (mem_x is None path).
    logits1, mem_x, mem_usage, ratio1 = usage_transformer_xl_forward(
        params, tokens1, None, None, num_heads=num_heads, mem_size=mem_size)

    # Step 2: attend over [memory ; x], update usage, evict with top-k.
    logits2, mem_x2, mem_usage2, ratio2 = usage_transformer_xl_forward(
        params, tokens2, mem_x, mem_usage,
        num_heads=num_heads, mem_size=mem_size)

    jax.block_until_ready((logits1, logits2, mem_x2, mem_usage2))

    assert logits1.shape == (B, T, vocab_size)
    assert logits2.shape == (B, T, vocab_size)
    assert mem_x.shape == (T, embed_dim)
    assert mem_x2.shape == (mem_size, embed_dim)
    assert mem_usage2.shape == (mem_size,)
    assert abs(ratio1 - 1.0) < 1e-6
    assert abs(ratio2 - mem_size / (T + T)) < 1e-6

    print("KERNEL_OK")
</pallas_src>

<mosaic_0001>
module attributes {stable_mosaic.version = 11 : i64} {
  func.func @_attn_ffn_kernel(%arg0: memref<16x32xf32, #tpu.memory_space<vmem>>, %arg1: memref<32x32xbf16, #tpu.memory_space<vmem>>, %arg2: memref<32x32xbf16, #tpu.memory_space<vmem>>, %arg3: memref<32x32xbf16, #tpu.memory_space<vmem>>, %arg4: memref<1x32xf32, #tpu.memory_space<vmem>>, %arg5: memref<1x32xf32, #tpu.memory_space<vmem>>, %arg6: memref<1x32xf32, #tpu.memory_space<vmem>>, %arg7: memref<32x32xbf16, #tpu.memory_space<vmem>>, %arg8: memref<1x32xf32, #tpu.memory_space<vmem>>, %arg9: memref<1x32xf32, #tpu.memory_space<vmem>>, %arg10: memref<1x32xf32, #tpu.memory_space<vmem>>, %arg11: memref<32x128xbf16, #tpu.memory_space<vmem>>, %arg12: memref<1x128xf32, #tpu.memory_space<vmem>>, %arg13: memref<128x32xbf16, #tpu.memory_space<vmem>>, %arg14: memref<1x32xf32, #tpu.memory_space<vmem>>, %arg15: memref<1x32xf32, #tpu.memory_space<vmem>>, %arg16: memref<1x32xf32, #tpu.memory_space<vmem>>, %arg17: memref<16x32xbf16, #tpu.memory_space<vmem>>) attributes {dimension_semantics = [], scalar_prefetch = 0 : i64, scratch_operands = 0 : i64, tpu.core_type = #tpu.core_type<tc>} {
    %c0 = arith.constant 0 : index
    %c0_0 = arith.constant 0 : index
    %0 = vector.load %arg0[%c0, %c0_0] : memref<16x32xf32, #tpu.memory_space<vmem>>, vector<16x32xf32>
    %1 = arith.truncf %0 : vector<16x32xf32> to vector<16x32xbf16>
    %c0_1 = arith.constant 0 : index
    %c0_2 = arith.constant 0 : index
    %2 = vector.load %arg1[%c0_1, %c0_2] : memref<32x32xbf16, #tpu.memory_space<vmem>>, vector<32x32xbf16>
    %cst = arith.constant dense<0.000000e+00> : vector<16x32xf32>
    %3 = tpu.matmul %1, %2, %cst {dimension_numbers = #tpu.dot_dimension_numbers<[1], [0], [0], [1], [0, 0, 1, 1], [], []>} : vector<16x32xbf16>, vector<32x32xbf16>, vector<16x32xf32> -> vector<16x32xf32>
    %c0_3 = arith.constant 0 : index
    %c0_4 = arith.constant 0 : index
    %4 = vector.load %arg4[%c0_3, %c0_4] : memref<1x32xf32, #tpu.memory_space<vmem>>, vector<1x32xf32>
    %5 = vector.broadcast %4 : vector<1x32xf32> to vector<16x32xf32>
    %6 = arith.addf %3, %5 : vector<16x32xf32>
    %cst_5 = arith.constant 0.353553385 : f32
    %7 = vector.broadcast %cst_5 : f32 to vector<16x32xf32>
    %8 = arith.mulf %6, %7 : vector<16x32xf32>
    %c0_6 = arith.constant 0 : index
    %c0_7 = arith.constant 0 : index
    %9 = vector.load %arg2[%c0_6, %c0_7] : memref<32x32xbf16, #tpu.memory_space<vmem>>, vector<32x32xbf16>
    %cst_8 = arith.constant dense<0.000000e+00> : vector<16x32xf32>
    %10 = tpu.matmul %1, %9, %cst_8 {dimension_numbers = #tpu.dot_dimension_numbers<[1], [0], [0], [1], [0, 0, 1, 1], [], []>} : vector<16x32xbf16>, vector<32x32xbf16>, vector<16x32xf32> -> vector<16x32xf32>
    %c0_9 = arith.constant 0 : index
    %c0_10 = arith.constant 0 : index
    %11 = vector.load %arg5[%c0_9, %c0_10] : memref<1x32xf32, #tpu.memory_space<vmem>>, vector<1x32xf32>
    %12 = vector.broadcast %11 : vector<1x32xf32> to vector<16x32xf32>
    %13 = arith.addf %10, %12 : vector<16x32xf32>
    %c0_11 = arith.constant 0 : index
    %c0_12 = arith.constant 0 : index
    %14 = vector.load %arg3[%c0_11, %c0_12] : memref<32x32xbf16, #tpu.memory_space<vmem>>, vector<32x32xbf16>
    %cst_13 = arith.constant dense<0.000000e+00> : vector<16x32xf32>
    %15 = tpu.matmul %1, %14, %cst_13 {dimension_numbers = #tpu.dot_dimension_numbers<[1], [0], [0], [1], [0, 0, 1, 1], [], []>} : vector<16x32xbf16>, vector<32x32xbf16>, vector<16x32xf32> -> vector<16x32xf32>
    %c0_14 = arith.constant 0 : index
    %c0_15 = arith.constant 0 : index
    %16 = vector.load %arg6[%c0_14, %c0_15] : memref<1x32xf32, #tpu.memory_space<vmem>>, vector<1x32xf32>
    %17 = vector.broadcast %16 : vector<1x32xf32> to vector<16x32xf32>
    %18 = arith.addf %15, %17 : vector<16x32xf32>
    %19 = vector.shape_cast %8 : vector<16x32xf32> to vector<16x4x8xf32>
    %20 = tpu.transpose %19, [1, 0, 2] : vector<16x4x8xf32> -> vector<4x16x8xf32>
    %21 = vector.shape_cast %20 : vector<4x16x8xf32> to vector<8x8x8xf32>
    %22 = arith.truncf %21 : vector<8x8x8xf32> to vector<8x8x8xbf16>
    %23 = vector.shape_cast %13 : vector<16x32xf32> to vector<16x4x8xf32>
    %24 = tpu.transpose %23, [1, 0, 2] : vector<16x4x8xf32> -> vector<4x16x8xf32>
    %25 = vector.shape_cast %24 : vector<4x16x8xf32> to vector<8x8x8xf32>
    %26 = arith.truncf %25 : vector<8x8x8xf32> to vector<8x8x8xbf16>
    %27 = vector.shape_cast %18 : vector<16x32xf32> to vector<16x4x8xf32>
    %28 = tpu.transpose %27, [1, 0, 2] : vector<16x4x8xf32> -> vector<4x16x8xf32>
    %29 = vector.shape_cast %28 : vector<4x16x8xf32> to vector<8x8x8xf32>
    %30 = arith.truncf %29 : vector<8x8x8xf32> to vector<8x8x8xbf16>
    "tpu.trace_start"() <{level = 10 : i32, message = "bqd,bkd->bqk"}> : () -> ()
    %cst_16 = arith.constant dense<0.000000e+00> : vector<8x8x8xf32>
    %31 = tpu.matmul %22, %26, %cst_16 {dimension_numbers = #tpu.dot_dimension_numbers<[2], [2], [1], [1], [0, 0, 0, 1, 1, 1], [0], [0]>} : vector<8x8x8xbf16>, vector<8x8x8xbf16>, vector<8x8x8xf32> -> vector<8x8x8xf32>
    "tpu.trace_stop"() : () -> ()
    %cst_17 = arith.constant dense<0xFF800000> : vector<8x8xf32>
    %32 = vector.multi_reduction <maximumf>, %31, %cst_17 [2] : vector<8x8x8xf32> to vector<8x8xf32>
    %33 = vector.shape_cast %32 : vector<8x8xf32> to vector<8x8x1xf32>
    %34 = vector.broadcast %33 : vector<8x8x1xf32> to vector<8x8x8xf32>
    %35 = arith.subf %31, %34 : vector<8x8x8xf32>
    %36 = math.exp %35 : vector<8x8x8xf32>
    %cst_18 = arith.constant dense<0.000000e+00> : vector<8x8xf32>
    %37 = vector.multi_reduction <add>, %36, %cst_18 [2] : vector<8x8x8xf32> to vector<8x8xf32>
    %38 = vector.shape_cast %37 : vector<8x8xf32> to vector<8x8x1xf32>
    %39 = tpu.reciprocal %38 {approx = true} : vector<8x8x1xf32> -> vector<8x8x1xf32>
    %40 = vector.broadcast %39 : vector<8x8x1xf32> to vector<8x8x8xf32>
    %41 = arith.mulf %36, %40 : vector<8x8x8xf32>
    %42 = arith.truncf %41 : vector<8x8x8xf32> to vector<8x8x8xbf16>
    "tpu.trace_start"() <{level = 10 : i32, message = "bqk,bkd->bqd"}> : () -> ()
    %cst_19 = arith.constant dense<0.000000e+00> : vector<8x8x8xf32>
    %43 = tpu.matmul %42, %30, %cst_19 {dimension_numbers = #tpu.dot_dimension_numbers<[2], [1], [1], [2], [0, 0, 0, 1, 1, 2], [0], [0]>} : vector<8x8x8xbf16>, vector<8x8x8xbf16>, vector<8x8x8xf32> -> vector<8x8x8xf32>
    "tpu.trace_stop"() : () -> ()
    %44 = vector.shape_cast %43 : vector<8x8x8xf32> to vector<4x16x8xf32>
    %45 = tpu.transpose %44, [1, 0, 2] : vector<4x16x8xf32> -> vector<16x4x8xf32>
    %46 = vector.shape_cast %45 : vector<16x4x8xf32> to vector<16x32xf32>
    %47 = arith.truncf %46 : vector<16x32xf32> to vector<16x32xbf16>
    %c0_20 = arith.constant 0 : index
    %c0_21 = arith.constant 0 : index
    %48 = vector.load %arg7[%c0_20, %c0_21] : memref<32x32xbf16, #tpu.memory_space<vmem>>, vector<32x32xbf16>
    %cst_22 = arith.constant dense<0.000000e+00> : vector<16x32xf32>
    %49 = tpu.matmul %47, %48, %cst_22 {dimension_numbers = #tpu.dot_dimension_numbers<[1], [0], [0], [1], [0, 0, 1, 1], [], []>} : vector<16x32xbf16>, vector<32x32xbf16>, vector<16x32xf32> -> vector<16x32xf32>
    %c0_23 = arith.constant 0 : index
    %c0_24 = arith.constant 0 : index
    %50 = vector.load %arg8[%c0_23, %c0_24] : memref<1x32xf32, #tpu.memory_space<vmem>>, vector<1x32xf32>
    %51 = vector.broadcast %50 : vector<1x32xf32> to vector<16x32xf32>
    %52 = arith.addf %49, %51 : vector<16x32xf32>
    %53 = arith.addf %0, %52 : vector<16x32xf32>
    %c0_25 = arith.constant 0 : index
    %c0_26 = arith.constant 0 : index
    %54 = vector.load %arg9[%c0_25, %c0_26] : memref<1x32xf32, #tpu.memory_space<vmem>>, vector<1x32xf32>
    %c0_27 = arith.constant 0 : index
    %c0_28 = arith.constant 0 : index
    %55 = vector.load %arg10[%c0_27, %c0_28] : memref<1x32xf32, #tpu.memory_space<vmem>>, vector<1x32xf32>
    %cst_29 = arith.constant dense<0.000000e+00> : vector<16xf32>
    %56 = vector.multi_reduction <add>, %53, %cst_29 [1] : vector<16x32xf32> to vector<16xf32>
    %57 = vector.shape_cast %56 : vector<16xf32> to vector<16x1xf32>
    %cst_30 = arith.constant 3.200000e+01 : f32
    %58 = vector.broadcast %cst_30 : f32 to vector<16x1xf32>
    %59 = arith.divf %57, %58 : vector<16x1xf32>
    %60 = vector.broadcast %59 : vector<16x1xf32> to vector<16x32xf32>
    %61 = arith.subf %53, %60 : vector<16x32xf32>
    %62 = arith.mulf %61, %61 : vector<16x32xf32>
    %cst_31 = arith.constant dense<0.000000e+00> : vector<16xf32>
    %63 = vector.multi_reduction <add>, %62, %cst_31 [1] : vector<16x32xf32> to vector<16xf32>
    %64 = vector.shape_cast %63 : vector<16xf32> to vector<16x1xf32>
    %cst_32 = arith.constant 3.200000e+01 : f32
    %65 = vector.broadcast %cst_32 : f32 to vector<16x1xf32>
    %66 = arith.divf %64, %65 : vector<16x1xf32>
    %67 = vector.broadcast %59 : vector<16x1xf32> to vector<16x32xf32>
    %68 = arith.subf %53, %67 : vector<16x32xf32>
    %cst_33 = arith.constant 9.99999974E-6 : f32
    %69 = vector.broadcast %cst_33 : f32 to vector<16x1xf32>
    %70 = arith.addf %66, %69 : vector<16x1xf32>
    %71 = math.rsqrt %70 : vector<16x1xf32>
    %72 = vector.broadcast %71 : vector<16x1xf32> to vector<16x32xf32>
    %73 = arith.mulf %68, %72 : vector<16x32xf32>
    %74 = vector.broadcast %54 : vector<1x32xf32> to vector<16x32xf32>
    %75 = arith.mulf %73, %74 : vector<16x32xf32>
    %76 = vector.broadcast %55 : vector<1x32xf32> to vector<16x32xf32>
    %77 = arith.addf %75, %76 : vector<16x32xf32>
    %78 = arith.truncf %77 : vector<16x32xf32> to vector<16x32xbf16>
    %c0_34 = arith.constant 0 : index
    %c0_35 = arith.constant 0 : index
    %79 = vector.load %arg11[%c0_34, %c0_35] : memref<32x128xbf16, #tpu.memory_space<vmem>>, vector<32x128xbf16>
    %cst_36 = arith.constant dense<0.000000e+00> : vector<16x128xf32>
    %80 = tpu.matmul %78, %79, %cst_36 {dimension_numbers = #tpu.dot_dimension_numbers<[1], [0], [0], [1], [0, 0, 1, 1], [], []>} : vector<16x32xbf16>, vector<32x128xbf16>, vector<16x128xf32> -> vector<16x128xf32>
    %c0_37 = arith.constant 0 : index
    %c0_38 = arith.constant 0 : index
    %81 = vector.load %arg12[%c0_37, %c0_38] : memref<1x128xf32, #tpu.memory_space<vmem>>, vector<1x128xf32>
    %82 = vector.broadcast %81 : vector<1x128xf32> to vector<16x128xf32>
    %83 = arith.addf %80, %82 : vector<16x128xf32>
    %cst_39 = arith.constant 0.000000e+00 : f32
    %84 = vector.broadcast %cst_39 : f32 to vector<16x128xf32>
    %85 = arith.maximumf %83, %84 : vector<16x128xf32>
    %86 = arith.truncf %85 : vector<16x128xf32> to vector<16x128xbf16>
    %c0_40 = arith.constant 0 : index
    %c0_41 = arith.constant 0 : index
    %87 = vector.load %arg13[%c0_40, %c0_41] : memref<128x32xbf16, #tpu.memory_space<vmem>>, vector<128x32xbf16>
    %cst_42 = arith.constant dense<0.000000e+00> : vector<16x32xf32>
    %88 = tpu.matmul %86, %87, %cst_42 {dimension_numbers = #tpu.dot_dimension_numbers<[1], [0], [0], [1], [0, 0, 1, 1], [], []>} : vector<16x128xbf16>, vector<128x32xbf16>, vector<16x32xf32> -> vector<16x32xf32>
    %c0_43 = arith.constant 0 : index
    %c0_44 = arith.constant 0 : index
    %89 = vector.load %arg14[%c0_43, %c0_44] : memref<1x32xf32, #tpu.memory_space<vmem>>, vector<1x32xf32>
    %90 = vector.broadcast %89 : vector<1x32xf32> to vector<16x32xf32>
    %91 = arith.addf %88, %90 : vector<16x32xf32>
    %92 = arith.addf %77, %91 : vector<16x32xf32>
    %c0_45 = arith.constant 0 : index
    %c0_46 = arith.constant 0 : index
    %93 = vector.load %arg15[%c0_45, %c0_46] : memref<1x32xf32, #tpu.memory_space<vmem>>, vector<1x32xf32>
    %c0_47 = arith.constant 0 : index
    %c0_48 = arith.constant 0 : index
    %94 = vector.load %arg16[%c0_47, %c0_48] : memref<1x32xf32, #tpu.memory_space<vmem>>, vector<1x32xf32>
    %cst_49 = arith.constant dense<0.000000e+00> : vector<16xf32>
    %95 = vector.multi_reduction <add>, %92, %cst_49 [1] : vector<16x32xf32> to vector<16xf32>
    %96 = vector.shape_cast %95 : vector<16xf32> to vector<16x1xf32>
    %cst_50 = arith.constant 3.200000e+01 : f32
    %97 = vector.broadcast %cst_50 : f32 to vector<16x1xf32>
    %98 = arith.divf %96, %97 : vector<16x1xf32>
    %99 = vector.broadcast %98 : vector<16x1xf32> to vector<16x32xf32>
    %100 = arith.subf %92, %99 : vector<16x32xf32>
    %101 = arith.mulf %100, %100 : vector<16x32xf32>
    %cst_51 = arith.constant dense<0.000000e+00> : vector<16xf32>
    %102 = vector.multi_reduction <add>, %101, %cst_51 [1] : vector<16x32xf32> to vector<16xf32>
    %103 = vector.shape_cast %102 : vector<16xf32> to vector<16x1xf32>
    %cst_52 = arith.constant 3.200000e+01 : f32
    %104 = vector.broadcast %cst_52 : f32 to vector<16x1xf32>
    %105 = arith.divf %103, %104 : vector<16x1xf32>
    %106 = vector.broadcast %98 : vector<16x1xf32> to vector<16x32xf32>
    %107 = arith.subf %92, %106 : vector<16x32xf32>
    %cst_53 = arith.constant 9.99999974E-6 : f32
    %108 = vector.broadcast %cst_53 : f32 to vector<16x1xf32>
    %109 = arith.addf %105, %108 : vector<16x1xf32>
    %110 = math.rsqrt %109 : vector<16x1xf32>
    %111 = vector.broadcast %110 : vector<16x1xf32> to vector<16x32xf32>
    %112 = arith.mulf %107, %111 : vector<16x32xf32>
    %113 = vector.broadcast %93 : vector<1x32xf32> to vector<16x32xf32>
    %114 = arith.mulf %112, %113 : vector<16x32xf32>
    %115 = vector.broadcast %94 : vector<1x32xf32> to vector<16x32xf32>
    %116 = arith.addf %114, %115 : vector<16x32xf32>
    %117 = arith.truncf %116 : vector<16x32xf32> to vector<16x32xbf16>
    %c0_54 = arith.constant 0 : index
    %c0_55 = arith.constant 0 : index
    %118 = vector.load %arg17[%c0_54, %c0_55] : memref<16x32xbf16, #tpu.memory_space<vmem>>, vector<16x32xbf16>
    tpu.vector_store %arg17[%c0_54, %c0_55], %117 {strides = array<i32>} : memref<16x32xbf16, #tpu.memory_space<vmem>>, vector<16x32xbf16>,
    return
  }
}

</mosaic_0001>

<llo_original>
// kernel: tpu_custom_call.1
$region0: #{tpu_custom_call.1}
  #allocation0 [shape = 'u32[]', space=smem, size = 0x4, offset = 0x4, fixed_abs, tag = 'smem constant byte address 0x4 - core index']
  #allocation1 [shape = 'u32[144,128]{1,0:T(1,128)}', space=vmem, size = 0x12000, scoped, tag = 'internal scratch']
  %s0 = inlined_call_operand.vmem [shape: f32[16,32], index: 0, kind: input, shape index: {}]
  %s1 = inlined_call_operand.vmem [shape: bf16[32,32], index: 1, kind: input, shape index: {}]
  %s2 = inlined_call_operand.vmem [shape: bf16[32,32], index: 2, kind: input, shape index: {}]
  %s3 = inlined_call_operand.vmem [shape: bf16[32,32], index: 3, kind: input, shape index: {}]
  %s4 = inlined_call_operand.hbm [shape: f32[1,32], index: 4, kind: input, shape index: {}]
  %s5 = inlined_call_operand.hbm [shape: f32[1,32], index: 5, kind: input, shape index: {}]
  %s6 = inlined_call_operand.hbm [shape: f32[1,32], index: 6, kind: input, shape index: {}]
  %s7 = inlined_call_operand.vmem [shape: bf16[32,32], index: 7, kind: input, shape index: {}]
  %s8 = inlined_call_operand.hbm [shape: f32[1,32], index: 8, kind: input, shape index: {}]
  %s9 = inlined_call_operand.hbm [shape: f32[1,32], index: 9, kind: input, shape index: {}]
  %s10 = inlined_call_operand.vmem [shape: f32[1,32], index: 10, kind: input, shape index: {}]
  %s11 = inlined_call_operand.vmem [shape: bf16[32,128], index: 11, kind: input, shape index: {}]
  %s12 = inlined_call_operand.vmem [shape: f32[1,128], index: 12, kind: input, shape index: {}]
  %s13 = inlined_call_operand.vmem [shape: bf16[128,32], index: 13, kind: input, shape index: {}]
  %s14 = inlined_call_operand.vmem [shape: f32[1,32], index: 14, kind: input, shape index: {}]
  %s15 = inlined_call_operand.vmem [shape: f32[1,32], index: 15, kind: input, shape index: {}]
  %s16 = inlined_call_operand.vmem [shape: f32[1,32], index: 16, kind: input, shape index: {}]
  %s17 = inlined_call_operand.hbm [shape: bf16[16,32], index: 17, kind: output, shape index: {}]
  %s18 = sld [smem:[#allocation0]]
  $region98: #{tpu_custom_call.1} parent=0
    _
  %s20 = ssub.s32 1, %s18
  %s21 = scalar_select 0, %s20, %s18
  $region1: #{tpu_custom_call.1} parent=0
    #allocation2 [shape = 'u8[512]{0}', space=vmem, size = 0x400, scoped, tag = 'input window, operand 4, single buffered']
    #allocation3 [shape = 's32[1]{0}', space=sflag, size = 0x4, scoped, tag = 'scoped memory for tpu_custom_call.1']
    #allocation4 [shape = 's32[1]{0}', space=sflag, size = 0x4, scoped, tag = 'scoped memory for tpu_custom_call.1']
    #allocation5 [shape = 'u8[512]{0}', space=vmem, size = 0x400, scoped, tag = 'input window, operand 5, single buffered']
    #allocation6 [shape = 's32[1]{0}', space=sflag, size = 0x4, scoped, tag = 'scoped memory for tpu_custom_call.1']
    #allocation7 [shape = 'u8[512]{0}', space=vmem, size = 0x400, scoped, tag = 'input window, operand 6, single buffered']
    #allocation8 [shape = 'u8[512]{0}', space=vmem, size = 0x400, scoped, tag = 'input window, operand 8, single buffered']
    #allocation9 [shape = 's32[1]{0}', space=sflag, size = 0x4, scoped, tag = 'scoped memory for tpu_custom_call.1']
    #allocation10 [shape = 'u8[512]{0}', space=vmem, size = 0x400, scoped, tag = 'input window, operand 9, single buffered']
    #allocation11 [shape = 'u8[4096]{0}', space=vmem, size = 0x1000, scoped, tag = 'output window, operand 0, single buffered']
    %22 = vsyncpa [#allocation3], 0
    %23 = vsyncpa [#allocation6], 0
    %24 = vsyncpa [#allocation9], 0
    %25 = vsyncpa [#allocation4], 0
    // Predicated region
    $region2: #{tpu_custom_call.1} parent=1 // pred_check
      _
    $region3: #{tpu_custom_call.1} parent=1 // pred_check_branch
      %27 = sbr.rel (0) target = $region5
    $region4: #{tpu_custom_call.1} parent=1 // pred_region
      _
    $region5: #{tpu_custom_call.1} parent=1 // pred_fallthru
      _
    // Predicated region
    $region6: #{tpu_custom_call.1} parent=1 // pred_check
      _
    $region7: #{tpu_custom_call.1} parent=1 // pred_check_branch
      %29 = sbr.rel (0) target = $region9
    $region8: #{tpu_custom_call.1} parent=1 // pred_region
      _
    $region9: #{tpu_custom_call.1} parent=1 // pred_fallthru
      _
    // Predicated region
    $region10: #{tpu_custom_call.1} parent=1 // pred_check
      _
    $region11: #{tpu_custom_call.1} parent=1 // pred_check_branch
      %31 = sbr.rel (0) target = $region13
    $region12: #{tpu_custom_call.1} parent=1 // pred_region
      _
    $region13: #{tpu_custom_call.1} parent=1 // pred_fallthru
      _
    // Predicated region
    $region14: #{tpu_custom_call.1} parent=1 // pred_check
      _
    $region15: #{tpu_custom_call.1} parent=1 // pred_check_branch
      %33 = sbr.rel (0) target = $region17
    $region16: #{tpu_custom_call.1} parent=1 // pred_region
      _
    $region17: #{tpu_custom_call.1} parent=1 // pred_fallthru
      _
    // Predicated region
    $region18: #{tpu_custom_call.1} parent=1 // pred_check
      _
    $region19: #{tpu_custom_call.1} parent=1 // pred_check_branch
      %35 = sbr.rel (0) target = $region21
    $region20: #{tpu_custom_call.1} parent=1 // pred_region
      %s37 = ssub.s32 16, 16
      %38 = vsyncadd [#allocation3], %s37
      %s40 = sshll.u32 [#allocation2], 4
      %s41 = int_to_ptr.vmem [resolvable:$true] %s40
      %43 = dma.hbm_to_vmem [thread:$0]  %s4, 16, %s41, [#allocation3]
    $region21: #{tpu_custom_call.1} parent=1 // pred_fallthru
      _
    // Predicated region
    $region22: #{tpu_custom_call.1} parent=1 // pred_check
      _
    $region23: #{tpu_custom_call.1} parent=1 // pred_check_branch
      %45 = sbr.rel (0) target = $region25
    $region24: #{tpu_custom_call.1} parent=1 // pred_region
      %s47 = ssub.s32 16, 16
      %48 = vsyncadd [#allocation6], %s47
      %s50 = sshll.u32 [#allocation5], 4
      %s51 = int_to_ptr.vmem [resolvable:$true] %s50
      %53 = dma.hbm_to_vmem [thread:$0]  %s5, 16, %s51, [#allocation6]
    $region25: #{tpu_custom_call.1} parent=1 // pred_fallthru
      _
    // Predicated region
    $region26: #{tpu_custom_call.1} parent=1 // pred_check
      _
    $region27: #{tpu_custom_call.1} parent=1 // pred_check_branch
      %55 = sbr.rel (0) target = $region29
    $region28: #{tpu_custom_call.1} parent=1 // pred_region
      %s57 = ssub.s32 16, 16
      %58 = vsyncadd [#allocation6], %s57
      %s60 = sshll.u32 [#allocation7], 4
      %s61 = int_to_ptr.vmem [resolvable:$true] %s60
      %63 = dma.hbm_to_vmem [thread:$0]  %s6, 16, %s61, [#allocation6]
    $region29: #{tpu_custom_call.1} parent=1 // pred_fallthru
      _
    // Predicated region
    $region30: #{tpu_custom_call.1} parent=1 // pred_check
      _
    $region31: #{tpu_custom_call.1} parent=1 // pred_check_branch
      %65 = sbr.rel (0) target = $region33
    $region32: #{tpu_custom_call.1} parent=1 // pred_region
      _
    $region33: #{tpu_custom_call.1} parent=1 // pred_fallthru
      _
    // Predicated region
    $region34: #{tpu_custom_call.1} parent=1 // pred_check
      _
    $region35: #{tpu_custom_call.1} parent=1 // pred_check_branch
      %67 = sbr.rel (0) target = $region37
    $region36: #{tpu_custom_call.1} parent=1 // pred_region
      %s69 = ssub.s32 16, 16
      %70 = vsyncadd [#allocation9], %s69
      %s72 = sshll.u32 [#allocation8], 4
      %s73 = int_to_ptr.vmem [resolvable:$true] %s72
      %75 = dma.hbm_to_vmem [thread:$0]  %s8, 16, %s73, [#allocation9]
    $region37: #{tpu_custom_call.1} parent=1 // pred_fallthru
      _
    // Predicated region
    $region38: #{tpu_custom_call.1} parent=1 // pred_check
      _
    $region39: #{tpu_custom_call.1} parent=1 // pred_check_branch
      %77 = sbr.rel (0) target = $region41
    $region40: #{tpu_custom_call.1} parent=1 // pred_region
      %s79 = ssub.s32 16, 16
      %80 = vsyncadd [#allocation9], %s79
      %s82 = sshll.u32 [#allocation10], 4
      %s83 = int_to_ptr.vmem [resolvable:$true] %s82
      %85 = dma.hbm_to_vmem [thread:$0]  %s9, 16, %s83, [#allocation9]
    $region41: #{tpu_custom_call.1} parent=1 // pred_fallthru
      _
    // Predicated region
    $region42: #{tpu_custom_call.1} parent=1 // pred_check
      _
    $region43: #{tpu_custom_call.1} parent=1 // pred_check_branch
      %87 = sbr.rel (0) target = $region45
    $region44: #{tpu_custom_call.1} parent=1 // pred_region
      _
    $region45: #{tpu_custom_call.1} parent=1 // pred_fallthru
      _
    // Predicated region
    $region46: #{tpu_custom_call.1} parent=1 // pred_check
      _
    $region47: #{tpu_custom_call.1} parent=1 // pred_check_branch
      %89 = sbr.rel (0) target = $region49
    $region48: #{tpu_custom_call.1} parent=1 // pred_region
      _
    $region49: #{tpu_custom_call.1} parent=1 // pred_fallthru
      _
    // Predicated region
    $region50: #{tpu_custom_call.1} parent=1 // pred_check
      _
    $region51: #{tpu_custom_call.1} parent=1 // pred_check_branch
      %91 = sbr.rel (0) target = $region53
    $region52: #{tpu_custom_call.1} parent=1 // pred_region
      _
    $region53: #{tpu_custom_call.1} parent=1 // pred_fallthru
      _
    // Predicated region
    $region54: #{tpu_custom_call.1} parent=1 // pred_check
      _
    $region55: #{tpu_custom_call.1} parent=1 // pred_check_branch
      %93 = sbr.rel (0) target = $region57
    $region56: #{tpu_custom_call.1} parent=1 // pred_region
      _
    $region57: #{tpu_custom_call.1} parent=1 // pred_fallthru
      _
    // Predicated region
    $region58: #{tpu_custom_call.1} parent=1 // pred_check
      _
    $region59: #{tpu_custom_call.1} parent=1 // pred_check_branch
      %95 = sbr.rel (0) target = $region61
    $region60: #{tpu_custom_call.1} parent=1 // pred_region
      _
    $region61: #{tpu_custom_call.1} parent=1 // pred_fallthru
      _
    // Predicated region
    $region62: #{tpu_custom_call.1} parent=1 // pred_check
      _
    $region63: #{tpu_custom_call.1} parent=1 // pred_check_branch
      %97 = sbr.rel (0) target = $region65
    $region64: #{tpu_custom_call.1} parent=1 // pred_region
      _
    $region65: #{tpu_custom_call.1} parent=1 // pred_fallthru
      _
    // Predicated region
    $region66: #{tpu_custom_call.1} parent=1 // pred_check
      _
    $region67: #{tpu_custom_call.1} parent=1 // pred_check_branch
      %99 = sbr.rel (0) target = $region69
    $region68: #{tpu_custom_call.1} parent=1 // pred_region
      _
    $region69: #{tpu_custom_call.1} parent=1 // pred_fallthru
      _
    // Predicated region
    $region70: #{tpu_custom_call.1} parent=1 // pred_check
      _
    $region71: #{tpu_custom_call.1} parent=1 // pred_check_branch
      %101 = sbr.rel (0) target = $region73
    $region72: #{tpu_custom_call.1} parent=1 // pred_region
      %102 = dma.done [#allocation3], 16
    $region73: #{tpu_custom_call.1} parent=1 // pred_fallthru
      _
    // Predicated region
    $region74: #{tpu_custom_call.1} parent=1 // pred_check
      _
    $region75: #{tpu_custom_call.1} parent=1 // pred_check_branch
      %104 = sbr.rel (0) target = $region77
    $region76: #{tpu_custom_call.1} parent=1 // pred_region
      %105 = dma.done [#allocation6], 16
    $region77: #{tpu_custom_call.1} parent=1 // pred_fallthru
      _
    // Predicated region
    $region78: #{tpu_custom_call.1} parent=1 // pred_check
      _
    $region79: #{tpu_custom_call.1} parent=1 // pred_check_branch
      %107 = sbr.rel (0) target = $region81
    $region80: #{tpu_custom_call.1} parent=1 // pred_region
      %108 = dma.done [#allocation6], 16
    $region81: #{tpu_custom_call.1} parent=1 // pred_fallthru
      _
    // Predicated region
    $region82: #{tpu_custom_call.1} parent=1 // pred_check
      _
    $region83: #{tpu_custom_call.1} parent=1 // pred_check_branch
      %110 = sbr.rel (0) target = $region85
    $region84: #{tpu_custom_call.1} parent=1 // pred_region
      %111 = dma.done [#allocation9], 16
    $region85: #{tpu_custom_call.1} parent=1 // pred_fallthru
      _
    // Predicated region
    $region86: #{tpu_custom_call.1} parent=1 // pred_check
      _
    $region87: #{tpu_custom_call.1} parent=1 // pred_check_branch
      %113 = sbr.rel (0) target = $region89
    $region88: #{tpu_custom_call.1} parent=1 // pred_region
      %114 = dma.done [#allocation9], 16
    $region89: #{tpu_custom_call.1} parent=1 // pred_fallthru
      _
    %v116 = vld [vmem:[%s0] sm:$0xff]
    %v117 = vld [vmem:[%s0 + $0x8] sm:$0xff]
    %v118 = vpack.c.bf16 %v117, %v116
    %v119 = vld [vmem:[%s1] sm:$0xf]
    %v120 = vld [vmem:[%s1 + $0x4] sm:$0xf]
    %v121 = vld [vmem:[%s1 + $0x8] sm:$0xf]
    %v122 = vld [vmem:[%s1 + $0xc] sm:$0xf]
    %v123 = vld [vmem:[#allocation2] sm:$0x1]
    %v125 = vlaneseq
    %v126 = vshrl.u32 %v125, 7
    %v127 = vsub.s32 0, %v126
    %v128 = vrot.slane %v123, %v127
    %v134 = vunpack.c.l.b16 %v119
    %v135 = vunpack.c.l.b16 %v120
    %v136 = vunpack.c.l.b16 %v121
    %v137 = vunpack.c.l.b16 %v122
    %v138 = vpack.c.b16 %v135, %v134
    %v139 = vpack.c.b16 %v137, %v136
    %vm142 = vcmask 261120
    %v144 = vsel %vm142, %v118, 0
    %146 = vmatprep.subr.bf16.mxu0 0
    %147 = vmatpush1.bf16.msra.mxu0 0
    %148 = vmatprep.subr.bf16.mxu0 0
    %149 = vmatpush1.bf16.msra.mxu0 0
    %150 = vmatprep.subr.bf16.mxu0 0
    %151 = vmatpush1.bf16.msra.mxu0 0
    %152 = vmatprep.subr.bf16.mxu0 0
    %153 = vmatpush1.bf16.msra.mxu0 0
    %154 = vmatprep.subr.bf16.mxu0 0
    %155 = vmatpush1.bf16.msra.mxu0 0
    %156 = vmatprep.subr.bf16.mxu0 0
    %157 = vmatpush1.bf16.msra.mxu0 0
    %158 = vmatprep.subr.bf16.mxu0 0
    %159 = vmatpush1.bf16.msra.mxu0 %v139
    %160 = vmatprep.subr.bf16.mxu0 0
    %161 = vmatpush1.bf16.msra.mxu0 %v138
    %162 = vmatprep.subr.bf16.mxu0 0
    %163 = vmatpush2.bf16.msra.mxu0 0
    %164 = vmatprep.subr.bf16.mxu0 0
    %165 = vmatpush2.bf16.msra.mxu0 0
    %166 = vmatprep.subr.bf16.mxu0 0
    %167 = vmatpush2.bf16.msra.mxu0 0
    %168 = vmatprep.subr.bf16.mxu0 0
    %169 = vmatpush2.bf16.msra.mxu0 0
    %170 = vmatprep.subr.bf16.mxu0 0
    %171 = vmatpush2.bf16.msra.mxu0 0
    %172 = vmatprep.subr.bf16.mxu0 0
    %173 = vmatpush2.bf16.msra.mxu0 0
    %174 = vmatprep.subr.bf16.mxu0 0
    %175 = vmatpush2.bf16.msra.mxu0 0
    %176 = vmatprep.subr.bf16.mxu0 0
    %177 = vmatpush2.bf16.msra.mxu0 0
    %178 = vmatprep.mubr.bf16.mxu0 0
    %179 = vmatmul.mubr.bf16.gmra.mxu0 %v144
    %v180 = vpop.f32.mrf.mxu0
    %v181 = vadd.f32 %v128, %v180
    %v182 = vpop.f32.mrf.mxu0
    %v183 = vpop.f32.mrf.mxu0
    %v184 = vadd.f32 %v128, %v183
    %v185 = vpop.f32.mrf.mxu0
    %186 = vdwg.mxu0
    %v187 = vmul.f32 %v181, 0.35355338
    %v188 = vmul.f32 %v184, 0.35355338
    %v189 = vld [vmem:[%s2] sm:$0xf]
    %v190 = vld [vmem:[%s2 + $0x4] sm:$0xf]
    %v191 = vld [vmem:[%s2 + $0x8] sm:$0xf]
    %v192 = vld [vmem:[%s2 + $0xc] sm:$0xf]
    %v193 = vld [vmem:[#allocation5] sm:$0x1]
    %v195 = vlaneseq
    %v196 = vshrl.u32 %v195, 7
    %v197 = vsub.s32 0, %v196
    %v198 = vrot.slane %v193, %v197
    %v204 = vunpack.c.l.b16 %v189
    %v205 = vunpack.c.l.b16 %v190
    %v206 = vunpack.c.l.b16 %v191
    %v207 = vunpack.c.l.b16 %v192
    %v208 = vpack.c.b16 %v205, %v204
    %v209 = vpack.c.b16 %v207, %v206
    %212 = vmatprep.subr.bf16.mxu0 0
    %213 = vmatpush1.bf16.msra.mxu0 0
    %214 = vmatprep.subr.bf16.mxu0 0
    %215 = vmatpush1.bf16.msra.mxu0 0
    %216 = vmatprep.subr.bf16.mxu0 0
    %217 = vmatpush1.bf16.msra.mxu0 0
    %218 = vmatprep.subr.bf16.mxu0 0
    %219 = vmatpush1.bf16.msra.mxu0 0
    %220 = vmatprep.subr.bf16.mxu0 0
    %221 = vmatpush1.bf16.msra.mxu0 0
    %222 = vmatprep.subr.bf16.mxu0 0
    %223 = vmatpush1.bf16.msra.mxu0 0
    %224 = vmatprep.subr.bf16.mxu0 0
    %225 = vmatpush1.bf16.msra.mxu0 %v209
    %226 = vmatprep.subr.bf16.mxu0 0
    %227 = vmatpush1.bf16.msra.mxu0 %v208
    %228 = vmatprep.subr.bf16.mxu0 0
    %229 = vmatpush2.bf16.msra.mxu0 0
    %230 = vmatprep.subr.bf16.mxu0 0
    %231 = vmatpush2.bf16.msra.mxu0 0
    %232 = vmatprep.subr.bf16.mxu0 0
    %233 = vmatpush2.bf16.msra.mxu0 0
    %234 = vmatprep.subr.bf16.mxu0 0
    %235 = vmatpush2.bf16.msra.mxu0 0
    %236 = vmatprep.subr.bf16.mxu0 0
    %237 = vmatpush2.bf16.msra.mxu0 0
    %238 = vmatprep.subr.bf16.mxu0 0
    %239 = vmatpush2.bf16.msra.mxu0 0
    %240 = vmatprep.subr.bf16.mxu0 0
    %241 = vmatpush2.bf16.msra.mxu0 0
    %242 = vmatprep.subr.bf16.mxu0 0
    %243 = vmatpush2.bf16.msra.mxu0 0
    %244 = vmatprep.mubr.bf16.mxu0 0
    %245 = vmatmul.mubr.bf16.gmra.mxu0 %v144
    %v246 = vpop.f32.mrf.mxu0
    %v247 = vadd.f32 %v198, %v246
    %v248 = vpop.f32.mrf.mxu0
    %v249 = vpop.f32.mrf.mxu0
    %v250 = vadd.f32 %v198, %v249
    %v251 = vpop.f32.mrf.mxu0
    %252 = vdwg.mxu0
    %v253 = vld [vmem:[%s3] sm:$0xf]
    %v254 = vld [vmem:[%s3 + $0x4] sm:$0xf]
    %v255 = vld [vmem:[%s3 + $0x8] sm:$0xf]
    %v256 = vld [vmem:[%s3 + $0xc] sm:$0xf]
    %v257 = vld [vmem:[#allocation7] sm:$0x1]
    %v259 = vlaneseq
    %v260 = vshrl.u32 %v259, 7
    %v261 = vsub.s32 0, %v260
    %v262 = vrot.slane %v257, %v261
    %v268 = vunpack.c.l.b16 %v253
    %v269 = vunpack.c.l.b16 %v254
    %v270 = vunpack.c.l.b16 %v255
    %v271 = vunpack.c.l.b16 %v256
    %v272 = vpack.c.b16 %v269, %v268
    %v273 = vpack.c.b16 %v271, %v270
    %276 = vmatprep.subr.bf16.mxu0 0
    %277 = vmatpush1.bf16.msra.mxu0 0
    %278 = vmatprep.subr.bf16.mxu0 0
    %279 = vmatpush1.bf16.msra.mxu0 0
    %280 = vmatprep.subr.bf16.mxu0 0
    %281 = vmatpush1.bf16.msra.mxu0 0
    %282 = vmatprep.subr.bf16.mxu0 0
    %283 = vmatpush1.bf16.msra.mxu0 0
    %284 = vmatprep.subr.bf16.mxu0 0
    %285 = vmatpush1.bf16.msra.mxu0 0
    %286 = vmatprep.subr.bf16.mxu0 0
    %287 = vmatpush1.bf16.msra.mxu0 0
    %288 = vmatprep.subr.bf16.mxu0 0
    %289 = vmatpush1.bf16.msra.mxu0 %v273
    %290 = vmatprep.subr.bf16.mxu0 0
    %291 = vmatpush1.bf16.msra.mxu0 %v272
    %292 = vmatprep.subr.bf16.mxu0 0
    %293 = vmatpush2.bf16.msra.mxu0 0
    %294 = vmatprep.subr.bf16.mxu0 0
    %295 = vmatpush2.bf16.msra.mxu0 0
    %296 = vmatprep.subr.bf16.mxu0 0
    %297 = vmatpush2.bf16.msra.mxu0 0
    %298 = vmatprep.subr.bf16.mxu0 0
    %299 = vmatpush2.bf16.msra.mxu0 0
    %300 = vmatprep.subr.bf16.mxu0 0
    %301 = vmatpush2.bf16.msra.mxu0 0
    %302 = vmatprep.subr.bf16.mxu0 0
    %303 = vmatpush2.bf16.msra.mxu0 0
    %304 = vmatprep.subr.bf16.mxu0 0
    %305 = vmatpush2.bf16.msra.mxu0 0
    %306 = vmatprep.subr.bf16.mxu0 0
    %307 = vmatpush2.bf16.msra.mxu0 0
    %308 = vmatprep.mubr.bf16.mxu0 0
    %309 = vmatmul.mubr.bf16.gmra.mxu0 %v144
    %v310 = vpop.f32.mrf.mxu0
    %v311 = vadd.f32 %v262, %v310
    %v312 = vpop.f32.mrf.mxu0
    %v313 = vpop.f32.mrf.mxu0
    %v314 = vadd.f32 %v262, %v313
    %v315 = vpop.f32.mrf.mxu0
    %316 = vdwg.mxu0
    %319 = vrot.lane.b32.xlu0 %v187, 120
    %v320 = vpop.permute.xlu0 %319
    %321 = vrot.lane.b32.xlu0 %v188, 120
    %v322 = vpop.permute.xlu0 %321
    %325 = vrot.lane.b32.xlu0 %v187, 112
    %v326 = vpop.permute.xlu0 %325
    %327 = vrot.lane.b32.xlu0 %v188, 112
    %v328 = vpop.permute.xlu0 %327
    %331 = vrot.lane.b32.xlu0 %v187, 104
    %v332 = vpop.permute.xlu0 %331
    %333 = vrot.lane.b32.xlu0 %v188, 104
    %v334 = vpop.permute.xlu0 %333
    %v337 = vcombine.low %v187, %v326
    %v338 = vcombine.high %v187, %v326
    %v340 = vunpack.c.l.s4 1983009808
    %v341 = vunpack.c.0.s8 %v340
    %v342 = vlaneseq
    %v343 = vshrl.u32 %v342, 7
    %v344 = vsub.s32 %v341, %v343
    %v345 = vrot.slane %v337, %v344
    %v347 = vunpack.c.l.s4 1983009808
    %v348 = vunpack.c.0.s8 %v347
    %v349 = vlaneseq
    %v350 = vshrl.u32 %v349, 7
    %v351 = vsub.s32 %v348, %v350
    %v352 = vrot.slane %v338, %v351
    %v353 = vcombine.low %v320, %v332
    %v354 = vcombine.high %v320, %v332
    %v356 = vunpack.c.l.s4 1983009808
    %v357 = vunpack.c.0.s8 %v356
    %v358 = vlaneseq
    %v359 = vshrl.u32 %v358, 7
    %v360 = vsub.s32 %v357, %v359
    %v361 = vrot.slane %v353, %v360
    %v363 = vunpack.c.l.s4 1983009808
    %v364 = vunpack.c.0.s8 %v363
    %v365 = vlaneseq
    %v366 = vshrl.u32 %v365, 7
    %v367 = vsub.s32 %v364, %v366
    %v368 = vrot.slane %v354, %v367
    %v369 = vcombine.low %v345, %v361
    %v370 = vcombine.high %v345, %v361
    %v372 = vunpack.c.l.s4 1934713408
    %v373 = vunpack.c.0.s8 %v372
    %v374 = vlaneseq
    %v375 = vshrl.u32 %v374, 7
    %v376 = vsub.s32 %v373, %v375
    %v377 = vrot.slane %v369, %v376
    %v379 = vunpack.c.l.s4 1934713408
    %v380 = vunpack.c.0.s8 %v379
    %v381 = vlaneseq
    %v382 = vshrl.u32 %v381, 7
    %v383 = vsub.s32 %v380, %v382
    %v384 = vrot.slane %v370, %v383
    %v385 = vcombine.low %v352, %v368
    %v386 = vcombine.high %v352, %v368
    %v388 = vunpack.c.l.s4 1934713408
    %v389 = vunpack.c.0.s8 %v388
    %v390 = vlaneseq
    %v391 = vshrl.u32 %v390, 7
    %v392 = vsub.s32 %v389, %v391
    %v393 = vrot.slane %v385, %v392
    %v395 = vunpack.c.l.s4 1934713408
    %v396 = vunpack.c.0.s8 %v395
    %v397 = vlaneseq
    %v398 = vshrl.u32 %v397, 7
    %v399 = vsub.s32 %v396, %v398
    %v400 = vrot.slane %v386, %v399
    %v401 = vcombine.high %v377, 0.0
    %v402 = vcombine.high %v384, 0.0
    %v403 = vcombine.high %v393, 0.0
    %v404 = vcombine.high %v400, 0.0
    %v405 = vcombine.low %v188, %v328
    %v406 = vcombine.high %v188, %v328
    %v408 = vunpack.c.l.s4 1983009808
    %v409 = vunpack.c.0.s8 %v408
    %v410 = vlaneseq
    %v411 = vshrl.u32 %v410, 7
    %v412 = vsub.s32 %v409, %v411
    %v413 = vrot.slane %v405, %v412
    %v415 = vunpack.c.l.s4 1983009808
    %v416 = vunpack.c.0.s8 %v415
    %v417 = vlaneseq
    %v418 = vshrl.u32 %v417, 7
    %v419 = vsub.s32 %v416, %v418
    %v420 = vrot.slane %v406, %v419
    %v421 = vcombine.low %v322, %v334
    %v422 = vcombine.high %v322, %v334
    %v424 = vunpack.c.l.s4 1983009808
    %v425 = vunpack.c.0.s8 %v424
    %v426 = vlaneseq
    %v427 = vshrl.u32 %v426, 7
    %v428 = vsub.s32 %v425, %v427
    %v429 = vrot.slane %v421, %v428
    %v431 = vunpack.c.l.s4 1983009808
    %v432 = vunpack.c.0.s8 %v431
    %v433 = vlaneseq
    %v434 = vshrl.u32 %v433, 7
    %v435 = vsub.s32 %v432, %v434
    %v436 = vrot.slane %v422, %v435
    %v437 = vcombine.low %v413, %v429
    %v438 = vcombine.high %v413, %v429
    %v440 = vunpack.c.l.s4 1934713408
    %v441 = vunpack.c.0.s8 %v440
    %v442 = vlaneseq
    %v443 = vshrl.u32 %v442, 7
    %v444 = vsub.s32 %v441, %v443
    %v445 = vrot.slane %v437, %v444
    %v447 = vunpack.c.l.s4 1934713408
    %v448 = vunpack.c.0.s8 %v447
    %v449 = vlaneseq
    %v450 = vshrl.u32 %v449, 7
    %v451 = vsub.s32 %v448, %v450
    %v452 = vrot.slane %v438, %v451
    %v453 = vcombine.low %v420, %v436
    %v454 = vcombine.high %v420, %v436
    %v456 = vunpack.c.l.s4 1934713408
    %v457 = vunpack.c.0.s8 %v456
    %v458 = vlaneseq
    %v459 = vshrl.u32 %v458, 7
    %v460 = vsub.s32 %v457, %v459
    %v461 = vrot.slane %v453, %v460
    %v463 = vunpack.c.l.s4 1934713408
    %v464 = vunpack.c.0.s8 %v463
    %v465 = vlaneseq
    %v466 = vshrl.u32 %v465, 7
    %v467 = vsub.s32 %v464, %v466
    %v468 = vrot.slane %v454, %v467
    %v469 = vcombine.high %v445, 0.0
    %v470 = vcombine.high %v452, 0.0
    %v471 = vcombine.high %v461, 0.0
    %v472 = vcombine.high %v468, 0.0
    %v473 = vcombine.low %v377, %v384
    %v475 = vunpack.c.l.s4 1983009808
    %v476 = vunpack.c.0.s8 %v475
    %v477 = vlaneseq
    %v478 = vshrl.u32 %v477, 7
    %v479 = vsub.s32 %v476, %v478
    %v480 = vrot.slane %v473, %v479
    %v481 = vcombine.low %v401, %v402
    %v483 = vunpack.c.l.s4 1983009808
    %v484 = vunpack.c.0.s8 %v483
    %v485 = vlaneseq
    %v486 = vshrl.u32 %v485, 7
    %v487 = vsub.s32 %v484, %v486
    %v488 = vrot.slane %v481, %v487
    %v489 = vcombine.low %v393, %v400
    %v491 = vunpack.c.l.s4 1983009808
    %v492 = vunpack.c.0.s8 %v491
    %v493 = vlaneseq
    %v494 = vshrl.u32 %v493, 7
    %v495 = vsub.s32 %v492, %v494
    %v496 = vrot.slane %v489, %v495
    %v497 = vcombine.low %v403, %v404
    %v499 = vunpack.c.l.s4 1983009808
    %v500 = vunpack.c.0.s8 %v499
    %v501 = vlaneseq
    %v502 = vshrl.u32 %v501, 7
    %v503 = vsub.s32 %v500, %v502
    %v504 = vrot.slane %v497, %v503
    %v505 = vcombine.low %v480, %v488
    %v506 = vcombine.high %v480, %v488
    %v508 = vunpack.c.l.s4 1934713408
    %v509 = vunpack.c.0.s8 %v508
    %v510 = vlaneseq
    %v511 = vshrl.u32 %v510, 7
    %v512 = vsub.s32 %v509, %v511
    %v513 = vrot.slane %v505, %v512
    %v515 = vunpack.c.l.s4 1934713408
    %v516 = vunpack.c.0.s8 %v515
    %v517 = vlaneseq
    %v518 = vshrl.u32 %v517, 7
    %v519 = vsub.s32 %v516, %v518
    %v520 = vrot.slane %v506, %v519
    %v521 = vcombine.low %v496, %v504
    %v522 = vcombine.high %v496, %v504
    %v524 = vunpack.c.l.s4 1934713408
    %v525 = vunpack.c.0.s8 %v524
    %v526 = vlaneseq
    %v527 = vshrl.u32 %v526, 7
    %v528 = vsub.s32 %v525, %v527
    %v529 = vrot.slane %v521, %v528
    %v531 = vunpack.c.l.s4 1934713408
    %v532 = vunpack.c.0.s8 %v531
    %v533 = vlaneseq
    %v534 = vshrl.u32 %v533, 7
    %v535 = vsub.s32 %v532, %v534
    %v536 = vrot.slane %v522, %v535
    %v537 = vcombine.low %v513, %v529
    %v538 = vcombine.high %v513, %v529
    %v539 = vcombine.low %v520, %v536
    %v540 = vcombine.high %v520, %v536
    %v541 = vcombine.low %v445, %v452
    %v543 = vunpack.c.l.s4 1983009808
    %v544 = vunpack.c.0.s8 %v543
    %v545 = vlaneseq
    %v546 = vshrl.u32 %v545, 7
    %v547 = vsub.s32 %v544, %v546
    %v548 = vrot.slane %v541, %v547
    %v549 = vcombine.low %v469, %v470
    %v551 = vunpack.c.l.s4 1983009808
    %v552 = vunpack.c.0.s8 %v551
    %v553 = vlaneseq
    %v554 = vshrl.u32 %v553, 7
    %v555 = vsub.s32 %v552, %v554
    %v556 = vrot.slane %v549, %v555
    %v557 = vcombine.low %v461, %v468
    %v559 = vunpack.c.l.s4 1983009808
    %v560 = vunpack.c.0.s8 %v559
    %v561 = vlaneseq
    %v562 = vshrl.u32 %v561, 7
    %v563 = vsub.s32 %v560, %v562
    %v564 = vrot.slane %v557, %v563
    %v565 = vcombine.low %v471, %v472
    %v567 = vunpack.c.l.s4 1983009808
    %v568 = vunpack.c.0.s8 %v567
    %v569 = vlaneseq
    %v570 = vshrl.u32 %v569, 7
    %v571 = vsub.s32 %v568, %v570
    %v572 = vrot.slane %v565, %v571
    %v573 = vcombine.low %v548, %v556
    %v574 = vcombine.high %v548, %v556
    %v576 = vunpack.c.l.s4 1934713408
    %v577 = vunpack.c.0.s8 %v576
    %v578 = vlaneseq
    %v579 = vshrl.u32 %v578, 7
    %v580 = vsub.s32 %v577, %v579
    %v581 = vrot.slane %v573, %v580
    %v583 = vunpack.c.l.s4 1934713408
    %v584 = vunpack.c.0.s8 %v583
    %v585 = vlaneseq
    %v586 = vshrl.u32 %v585, 7
    %v587 = vsub.s32 %v584, %v586
    %v588 = vrot.slane %v574, %v587
    %v589 = vcombine.low %v564, %v572
    %v590 = vcombine.high %v564, %v572
    %v592 = vunpack.c.l.s4 1934713408
    %v593 = vunpack.c.0.s8 %v592
    %v594 = vlaneseq
    %v595 = vshrl.u32 %v594, 7
    %v596 = vsub.s32 %v593, %v595
    %v597 = vrot.slane %v589, %v596
    %v599 = vunpack.c.l.s4 1934713408
    %v600 = vunpack.c.0.s8 %v599
    %v601 = vlaneseq
    %v602 = vshrl.u32 %v601, 7
    %v603 = vsub.s32 %v600, %v602
    %v604 = vrot.slane %v590, %v603
    %v605 = vcombine.low %v581, %v597
    %v606 = vcombine.high %v581, %v597
    %v607 = vcombine.low %v588, %v604
    %v608 = vcombine.high %v588, %v604
    %v609 = vpack.c.bf16 %v537, %v537
    %v610 = vpack.c.bf16 %v605, %v605
    %v611 = vpack.c.bf16 %v538, %v538
    %v612 = vpack.c.bf16 %v606, %v606
    %v613 = vpack.c.bf16 %v539, %v539
    %v614 = vpack.c.bf16 %v607, %v607
    %v615 = vpack.c.bf16 %v540, %v540
    %v616 = vpack.c.bf16 %v608, %v608
    %619 = vrot.lane.b32.xlu0 %v247, 120
    %v620 = vpop.permute.xlu0 %619
    %621 = vrot.lane.b32.xlu0 %v250, 120
    %v622 = vpop.permute.xlu0 %621
    %625 = vrot.lane.b32.xlu0 %v247, 112
    %v626 = vpop.permute.xlu0 %625
    %627 = vrot.lane.b32.xlu0 %v250, 112
    %v628 = vpop.permute.xlu0 %627
    %631 = vrot.lane.b32.xlu0 %v247, 104
    %v632 = vpop.permute.xlu0 %631
    %633 = vrot.lane.b32.xlu0 %v250, 104
    %v634 = vpop.permute.xlu0 %633
    %v637 = vcombine.low %v247, %v626
    %v638 = vcombine.high %v247, %v626
    %v640 = vunpack.c.l.s4 1983009808
    %v641 = vunpack.c.0.s8 %v640
    %v642 = vlaneseq
    %v643 = vshrl.u32 %v642, 7
    %v644 = vsub.s32 %v641, %v643
    %v645 = vrot.slane %v637, %v644
    %v647 = vunpack.c.l.s4 1983009808
    %v648 = vunpack.c.0.s8 %v647
    %v649 = vlaneseq
    %v650 = vshrl.u32 %v649, 7
    %v651 = vsub.s32 %v648, %v650
    %v652 = vrot.slane %v638, %v651
    %v653 = vcombine.low %v620, %v632
    %v654 = vcombine.high %v620, %v632
    %v656 = vunpack.c.l.s4 1983009808
    %v657 = vunpack.c.0.s8 %v656
    %v658 = vlaneseq
    %v659 = vshrl.u32 %v658, 7
    %v660 = vsub.s32 %v657, %v659
    %v661 = vrot.slane %v653, %v660
    %v663 = vunpack.c.l.s4 1983009808
    %v664 = vunpack.c.0.s8 %v663
    %v665 = vlaneseq
    %v666 = vshrl.u32 %v665, 7
    %v667 = vsub.s32 %v664, %v666
    %v668 = vrot.slane %v654, %v667
    %v669 = vcombine.low %v645, %v661
    %v670 = vcombine.high %v645, %v661
    %v672 = vunpack.c.l.s4 1934713408
    %v673 = vunpack.c.0.s8 %v672
    %v674 = vlaneseq
    %v675 = vshrl.u32 %v674, 7
    %v676 = vsub.s32 %v673, %v675
    %v677 = vrot.slane %v669, %v676
    %v679 = vunpack.c.l.s4 1934713408
    %v680 = vunpack.c.0.s8 %v679
    %v681 = vlaneseq
    %v682 = vshrl.u32 %v681, 7
    %v683 = vsub.s32 %v680, %v682
    %v684 = vrot.slane %v670, %v683
    %v685 = vcombine.low %v652, %v668
    %v686 = vcombine.high %v652, %v668
    %v688 = vunpack.c.l.s4 1934713408
    %v689 = vunpack.c.0.s8 %v688
    %v690 = vlaneseq
    %v691 = vshrl.u32 %v690, 7
    %v692 = vsub.s32 %v689, %v691
    %v693 = vrot.slane %v685, %v692
    %v695 = vunpack.c.l.s4 1934713408
    %v696 = vunpack.c.0.s8 %v695
    %v697 = vlaneseq
    %v698 = vshrl.u32 %v697, 7
    %v699 = vsub.s32 %v696, %v698
    %v700 = vrot.slane %v686, %v699
    %v701 = vcombine.high %v677, 0.0
    %v702 = vcombine.high %v684, 0.0
    %v703 = vcombine.high %v693, 0.0
    %v704 = vcombine.high %v700, 0.0
    %v705 = vcombine.low %v250, %v628
    %v706 = vcombine.high %v250, %v628
    %v708 = vunpack.c.l.s4 1983009808
    %v709 = vunpack.c.0.s8 %v708
    %v710 = vlaneseq
    %v711 = vshrl.u32 %v710, 7
    %v712 = vsub.s32 %v709, %v711
    %v713 = vrot.slane %v705, %v712
    %v715 = vunpack.c.l.s4 1983009808
    %v716 = vunpack.c.0.s8 %v715
    %v717 = vlaneseq
    %v718 = vshrl.u32 %v717, 7
    %v719 = vsub.s32 %v716, %v718
    %v720 = vrot.slane %v706, %v719
    %v721 = vcombine.low %v622, %v634
    %v722 = vcombine.high %v622, %v634
    %v724 = vunpack.c.l.s4 1983009808
    %v725 = vunpack.c.0.s8 %v724
    %v726 = vlaneseq
    %v727 = vshrl.u32 %v726, 7
    %v728 = vsub.s32 %v725, %v727
    %v729 = vrot.slane %v721, %v728
    %v731 = vunpack.c.l.s4 1983009808
    %v732 = vunpack.c.0.s8 %v731
    %v733 = vlaneseq
    %v734 = vshrl.u32 %v733, 7
    %v735 = vsub.s32 %v732, %v734
    %v736 = vrot.slane %v722, %v735
    %v737 = vcombine.low %v713, %v729
    %v738 = vcombine.high %v713, %v729
    %v740 = vunpack.c.l.s4 1934713408
    %v741 = vunpack.c.0.s8 %v740
    %v742 = vlaneseq
    %v743 = vshrl.u32 %v742, 7
    %v744 = vsub.s32 %v741, %v743
    %v745 = vrot.slane %v737, %v744
    %v747 = vunpack.c.l.s4 1934713408
    %v748 = vunpack.c.0.s8 %v747
    %v749 = vlaneseq
    %v750 = vshrl.u32 %v749, 7
    %v751 = vsub.s32 %v748, %v750
    %v752 = vrot.slane %v738, %v751
    %v753 = vcombine.low %v720, %v736
    %v754 = vcombine.high %v720, %v736
    %v756 = vunpack.c.l.s4 1934713408
    %v757 = vunpack.c.0.s8 %v756
    %v758 = vlaneseq
    %v759 = vshrl.u32 %v758, 7
    %v760 = vsub.s32 %v757, %v759
    %v761 = vrot.slane %v753, %v760
    %v763 = vunpack.c.l.s4 1934713408
    %v764 = vunpack.c.0.s8 %v763
    %v765 = vlaneseq
    %v766 = vshrl.u32 %v765, 7
    %v767 = vsub.s32 %v764, %v766
    %v768 = vrot.slane %v754, %v767
    %v769 = vcombine.high %v745, 0.0
    %v770 = vcombine.high %v752, 0.0
    %v771 = vcombine.high %v761, 0.0
    %v772 = vcombine.high %v768, 0.0
    %v773 = vcombine.low %v677, %v684
    %v775 = vunpack.c.l.s4 1983009808
    %v776 = vunpack.c.0.s8 %v775
    %v777 = vlaneseq
    %v778 = vshrl.u32 %v777, 7
    %v779 = vsub.s32 %v776, %v778
    %v780 = vrot.slane %v773, %v779
    %v781 = vcombine.low %v701, %v702
    %v783 = vunpack.c.l.s4 1983009808
    %v784 = vunpack.c.0.s8 %v783
    %v785 = vlaneseq
    %v786 = vshrl.u32 %v785, 7
    %v787 = vsub.s32 %v784, %v786
    %v788 = vrot.slane %v781, %v787
    %v789 = vcombine.low %v693, %v700
    %v791 = vunpack.c.l.s4 1983009808
    %v792 = vunpack.c.0.s8 %v791
    %v793 = vlaneseq
    %v794 = vshrl.u32 %v793, 7
    %v795 = vsub.s32 %v792, %v794
    %v796 = vrot.slane %v789, %v795
    %v797 = vcombine.low %v703, %v704
    %v799 = vunpack.c.l.s4 1983009808
    %v800 = vunpack.c.0.s8 %v799
    %v801 = vlaneseq
    %v802 = vshrl.u32 %v801, 7
    %v803 = vsub.s32 %v800, %v802
    %v804 = vrot.slane %v797, %v803
    %v805 = vcombine.low %v780, %v788
    %v806 = vcombine.high %v780, %v788
    %v808 = vunpack.c.l.s4 1934713408
    %v809 = vunpack.c.0.s8 %v808
    %v810 = vlaneseq
    %v811 = vshrl.u32 %v810, 7
    %v812 = vsub.s32 %v809, %v811
    %v813 = vrot.slane %v805, %v812
    %v815 = vunpack.c.l.s4 1934713408
    %v816 = vunpack.c.0.s8 %v815
    %v817 = vlaneseq
    %v818 = vshrl.u32 %v817, 7
    %v819 = vsub.s32 %v816, %v818
    %v820 = vrot.slane %v806, %v819
    %v821 = vcombine.low %v796, %v804
    %v822 = vcombine.high %v796, %v804
    %v824 = vunpack.c.l.s4 1934713408
    %v825 = vunpack.c.0.s8 %v824
    %v826 = vlaneseq
    %v827 = vshrl.u32 %v826, 7
    %v828 = vsub.s32 %v825, %v827
    %v829 = vrot.slane %v821, %v828
    %v831 = vunpack.c.l.s4 1934713408
    %v832 = vunpack.c.0.s8 %v831
    %v833 = vlaneseq
    %v834 = vshrl.u32 %v833, 7
    %v835 = vsub.s32 %v832, %v834
    %v836 = vrot.slane %v822, %v835
    %v837 = vcombine.low %v813, %v829
    %v838 = vcombine.high %v813, %v829
    %v839 = vcombine.low %v820, %v836
    %v840 = vcombine.high %v820, %v836
    %v841 = vcombine.low %v745, %v752
    %v843 = vunpack.c.l.s4 1983009808
    %v844 = vunpack.c.0.s8 %v843
    %v845 = vlaneseq
    %v846 = vshrl.u32 %v845, 7
    %v847 = vsub.s32 %v844, %v846
    %v848 = vrot.slane %v841, %v847
    %v849 = vcombine.low %v769, %v770
    %v851 = vunpack.c.l.s4 1983009808
    %v852 = vunpack.c.0.s8 %v851
    %v853 = vlaneseq
    %v854 = vshrl.u32 %v853, 7
    %v855 = vsub.s32 %v852, %v854
    %v856 = vrot.slane %v849, %v855
    %v857 = vcombine.low %v761, %v768
    %v859 = vunpack.c.l.s4 1983009808
    %v860 = vunpack.c.0.s8 %v859
    %v861 = vlaneseq
    %v862 = vshrl.u32 %v861, 7
    %v863 = vsub.s32 %v860, %v862
    %v864 = vrot.slane %v857, %v863
    %v865 = vcombine.low %v771, %v772
    %v867 = vunpack.c.l.s4 1983009808
    %v868 = vunpack.c.0.s8 %v867
    %v869 = vlaneseq
    %v870 = vshrl.u32 %v869, 7
    %v871 = vsub.s32 %v868, %v870
    %v872 = vrot.slane %v865, %v871
    %v873 = vcombine.low %v848, %v856
    %v874 = vcombine.high %v848, %v856
    %v876 = vunpack.c.l.s4 1934713408
    %v877 = vunpack.c.0.s8 %v876
    %v878 = vlaneseq
    %v879 = vshrl.u32 %v878, 7
    %v880 = vsub.s32 %v877, %v879
    %v881 = vrot.slane %v873, %v880
    %v883 = vunpack.c.l.s4 1934713408
    %v884 = vunpack.c.0.s8 %v883
    %v885 = vlaneseq
    %v886 = vshrl.u32 %v885, 7
    %v887 = vsub.s32 %v884, %v886
    %v888 = vrot.slane %v874, %v887
    %v889 = vcombine.low %v864, %v872
    %v890 = vcombine.high %v864, %v872
    %v892 = vunpack.c.l.s4 1934713408
    %v893 = vunpack.c.0.s8 %v892
    %v894 = vlaneseq
    %v895 = vshrl.u32 %v894, 7
    %v896 = vsub.s32 %v893, %v895
    %v897 = vrot.slane %v889, %v896
    %v899 = vunpack.c.l.s4 1934713408
    %v900 = vunpack.c.0.s8 %v899
    %v901 = vlaneseq
    %v902 = vshrl.u32 %v901, 7
    %v903 = vsub.s32 %v900, %v902
    %v904 = vrot.slane %v890, %v903
    %v905 = vcombine.low %v881, %v897
    %v906 = vcombine.high %v881, %v897
    %v907 = vcombine.low %v888, %v904
    %v908 = vcombine.high %v888, %v904
    %v909 = vpack.c.bf16 %v837, %v837
    %v910 = vpack.c.bf16 %v905, %v905
    %v911 = vpack.c.bf16 %v838, %v838
    %v912 = vpack.c.bf16 %v906, %v906
    %v913 = vpack.c.bf16 %v839, %v839
    %v914 = vpack.c.bf16 %v907, %v907
    %v915 = vpack.c.bf16 %v840, %v840
    %v916 = vpack.c.bf16 %v908, %v908
    %919 = vrot.lane.b32.xlu0 %v311, 120
    %v920 = vpop.permute.xlu0 %919
    %921 = vrot.lane.b32.xlu0 %v314, 120
    %v922 = vpop.permute.xlu0 %921
    %925 = vrot.lane.b32.xlu0 %v311, 112
    %v926 = vpop.permute.xlu0 %925
    %927 = vrot.lane.b32.xlu0 %v314, 112
    %v928 = vpop.permute.xlu0 %927
    %931 = vrot.lane.b32.xlu0 %v311, 104
    %v932 = vpop.permute.xlu0 %931
    %933 = vrot.lane.b32.xlu0 %v314, 104
    %v934 = vpop.permute.xlu0 %933
    %v937 = vcombine.low %v311, %v926
    %v938 = vcombine.high %v311, %v926
    %v940 = vunpack.c.l.s4 1983009808
    %v941 = vunpack.c.0.s8 %v940
    %v942 = vlaneseq
    %v943 = vshrl.u32 %v942, 7
    %v944 = vsub.s32 %v941, %v943
    %v945 = vrot.slane %v937, %v944
    %v947 = vunpack.c.l.s4 1983009808
    %v948 = vunpack.c.0.s8 %v947
    %v949 = vlaneseq
    %v950 = vshrl.u32 %v949, 7
    %v951 = vsub.s32 %v948, %v950
    %v952 = vrot.slane %v938, %v951
    %v953 = vcombine.low %v920, %v932
    %v954 = vcombine.high %v920, %v932
    %v956 = vunpack.c.l.s4 1983009808
    %v957 = vunpack.c.0.s8 %v956
    %v958 = vlaneseq
    %v959 = vshrl.u32 %v958, 7
    %v960 = vsub.s32 %v957, %v959
    %v961 = vrot.slane %v953, %v960
    %v963 = vunpack.c.l.s4 1983009808
    %v964 = vunpack.c.0.s8 %v963
    %v965 = vlaneseq
    %v966 = vshrl.u32 %v965, 7
    %v967 = vsub.s32 %v964, %v966
    %v968 = vrot.slane %v954, %v967
    %v969 = vcombine.low %v945, %v961
    %v970 = vcombine.high %v945, %v961
    %v972 = vunpack.c.l.s4 1934713408
    %v973 = vunpack.c.0.s8 %v972
    %v974 = vlaneseq
    %v975 = vshrl.u32 %v974, 7
    %v976 = vsub.s32 %v973, %v975
    %v977 = vrot.slane %v969, %v976
    %v979 = vunpack.c.l.s4 1934713408
    %v980 = vunpack.c.0.s8 %v979
    %v981 = vlaneseq
    %v982 = vshrl.u32 %v981, 7
    %v983 = vsub.s32 %v980, %v982
    %v984 = vrot.slane %v970, %v983
    %v985 = vcombine.low %v952, %v968
    %v986 = vcombine.high %v952, %v968
    %v988 = vunpack.c.l.s4 1934713408
    %v989 = vunpack.c.0.s8 %v988
    %v990 = vlaneseq
    %v991 = vshrl.u32 %v990, 7
    %v992 = vsub.s32 %v989, %v991
    %v993 = vrot.slane %v985, %v992
    %v995 = vunpack.c.l.s4 1934713408
    %v996 = vunpack.c.0.s8 %v995
    %v997 = vlaneseq
    %v998 = vshrl.u32 %v997, 7
    %v999 = vsub.s32 %v996, %v998
    %v1000 = vrot.slane %v986, %v999
    %v1001 = vcombine.high %v977, 0.0
    %v1002 = vcombine.high %v984, 0.0
    %v1003 = vcombine.high %v993, 0.0
    %v1004 = vcombine.high %v1000, 0.0
    %v1005 = vcombine.low %v314, %v928
    %v1006 = vcombine.high %v314, %v928
    %v1008 = vunpack.c.l.s4 1983009808
    %v1009 = vunpack.c.0.s8 %v1008
    %v1010 = vlaneseq
    %v1011 = vshrl.u32 %v1010, 7
    %v1012 = vsub.s32 %v1009, %v1011
    %v1013 = vrot.slane %v1005, %v1012
    %v1015 = vunpack.c.l.s4 1983009808
    %v1016 = vunpack.c.0.s8 %v1015
    %v1017 = vlaneseq
    %v1018 = vshrl.u32 %v1017, 7
    %v1019 = vsub.s32 %v1016, %v1018
    %v1020 = vrot.slane %v1006, %v1019
    %v1021 = vcombine.low %v922, %v934
    %v1022 = vcombine.high %v922, %v934
    %v1024 = vunpack.c.l.s4 1983009808
    %v1025 = vunpack.c.0.s8 %v1024
    %v1026 = vlaneseq
    %v1027 = vshrl.u32 %v1026, 7
    %v1028 = vsub.s32 %v1025, %v1027
    %v1029 = vrot.slane %v1021, %v1028
    %v1031 = vunpack.c.l.s4 1983009808
    %v1032 = vunpack.c.0.s8 %v1031
    %v1033 = vlaneseq
    %v1034 = vshrl.u32 %v1033, 7
    %v1035 = vsub.s32 %v1032, %v1034
    %v1036 = vrot.slane %v1022, %v1035
    %v1037 = vcombine.low %v1013, %v1029
    %v1038 = vcombine.high %v1013, %v1029
    %v1040 = vunpack.c.l.s4 1934713408
    %v1041 = vunpack.c.0.s8 %v1040
    %v1042 = vlaneseq
    %v1043 = vshrl.u32 %v1042, 7
    %v1044 = vsub.s32 %v1041, %v1043
    %v1045 = vrot.slane %v1037, %v1044
    %v1047 = vunpack.c.l.s4 1934713408
    %v1048 = vunpack.c.0.s8 %v1047
    %v1049 = vlaneseq
    %v1050 = vshrl.u32 %v1049, 7
    %v1051 = vsub.s32 %v1048, %v1050
    %v1052 = vrot.slane %v1038, %v1051
    %v1053 = vcombine.low %v1020, %v1036
    %v1054 = vcombine.high %v1020, %v1036
    %v1056 = vunpack.c.l.s4 1934713408
    %v1057 = vunpack.c.0.s8 %v1056
    %v1058 = vlaneseq
    %v1059 = vshrl.u32 %v1058, 7
    %v1060 = vsub.s32 %v1057, %v1059
    %v1061 = vrot.slane %v1053, %v1060
    %v1063 = vunpack.c.l.s4 1934713408
    %v1064 = vunpack.c.0.s8 %v1063
    %v1065 = vlaneseq
    %v1066 = vshrl.u32 %v1065, 7
    %v1067 = vsub.s32 %v1064, %v1066
    %v1068 = vrot.slane %v1054, %v1067
    %v1069 = vcombine.high %v1045, 0.0
    %v1070 = vcombine.high %v1052, 0.0
    %v1071 = vcombine.high %v1061, 0.0
    %v1072 = vcombine.high %v1068, 0.0
    %v1073 = vcombine.low %v977, %v984
    %v1075 = vunpack.c.l.s4 1983009808
    %v1076 = vunpack.c.0.s8 %v1075
    %v1077 = vlaneseq
    %v1078 = vshrl.u32 %v1077, 7
    %v1079 = vsub.s32 %v1076, %v1078
    %v1080 = vrot.slane %v1073, %v1079
    %v1081 = vcombine.low %v1001, %v1002
    %v1083 = vunpack.c.l.s4 1983009808
    %v1084 = vunpack.c.0.s8 %v1083
    %v1085 = vlaneseq
    %v1086 = vshrl.u32 %v1085, 7
    %v1087 = vsub.s32 %v1084, %v1086
    %v1088 = vrot.slane %v1081, %v1087
    %v1089 = vcombine.low %v993, %v1000
    %v1091 = vunpack.c.l.s4 1983009808
    %v1092 = vunpack.c.0.s8 %v1091
    %v1093 = vlaneseq
    %v1094 = vshrl.u32 %v1093, 7
    %v1095 = vsub.s32 %v1092, %v1094
    %v1096 = vrot.slane %v1089, %v1095
    %v1097 = vcombine.low %v1003, %v1004
    %v1099 = vunpack.c.l.s4 1983009808
    %v1100 = vunpack.c.0.s8 %v1099
    %v1101 = vlaneseq
    %v1102 = vshrl.u32 %v1101, 7
    %v1103 = vsub.s32 %v1100, %v1102
    %v1104 = vrot.slane %v1097, %v1103
    %v1105 = vcombine.low %v1080, %v1088
    %v1106 = vcombine.high %v1080, %v1088
    %v1108 = vunpack.c.l.s4 1934713408
    %v1109 = vunpack.c.0.s8 %v1108
    %v1110 = vlaneseq
    %v1111 = vshrl.u32 %v1110, 7
    %v1112 = vsub.s32 %v1109, %v1111
    %v1113 = vrot.slane %v1105, %v1112
    %v1115 = vunpack.c.l.s4 1934713408
    %v1116 = vunpack.c.0.s8 %v1115
    %v1117 = vlaneseq
    %v1118 = vshrl.u32 %v1117, 7
    %v1119 = vsub.s32 %v1116, %v1118
    %v1120 = vrot.slane %v1106, %v1119
    %v1121 = vcombine.low %v1096, %v1104
    %v1122 = vcombine.high %v1096, %v1104
    %v1124 = vunpack.c.l.s4 1934713408
    %v1125 = vunpack.c.0.s8 %v1124
    %v1126 = vlaneseq
    %v1127 = vshrl.u32 %v1126, 7
    %v1128 = vsub.s32 %v1125, %v1127
    %v1129 = vrot.slane %v1121, %v1128
    %v1131 = vunpack.c.l.s4 1934713408
    %v1132 = vunpack.c.0.s8 %v1131
    %v1133 = vlaneseq
    %v1134 = vshrl.u32 %v1133, 7
    %v1135 = vsub.s32 %v1132, %v1134
    %v1136 = vrot.slane %v1122, %v1135
    %v1137 = vcombine.low %v1113, %v1129
    %v1138 = vcombine.high %v1113, %v1129
    %v1139 = vcombine.low %v1120, %v1136
    %v1140 = vcombine.high %v1120, %v1136
    %v1141 = vcombine.low %v1045, %v1052
    %v1143 = vunpack.c.l.s4 1983009808
    %v1144 = vunpack.c.0.s8 %v1143
    %v1145 = vlaneseq
    %v1146 = vshrl.u32 %v1145, 7
    %v1147 = vsub.s32 %v1144, %v1146
    %v1148 = vrot.slane %v1141, %v1147
    %v1149 = vcombine.low %v1069, %v1070
    %v1151 = vunpack.c.l.s4 1983009808
    %v1152 = vunpack.c.0.s8 %v1151
    %v1153 = vlaneseq
    %v1154 = vshrl.u32 %v1153, 7
    %v1155 = vsub.s32 %v1152, %v1154
    %v1156 = vrot.slane %v1149, %v1155
    %v1157 = vcombine.low %v1061, %v1068
    %v1159 = vunpack.c.l.s4 1983009808
    %v1160 = vunpack.c.0.s8 %v1159
    %v1161 = vlaneseq
    %v1162 = vshrl.u32 %v1161, 7
    %v1163 = vsub.s32 %v1160, %v1162
    %v1164 = vrot.slane %v1157, %v1163
    %v1165 = vcombine.low %v1071, %v1072
    %v1167 = vunpack.c.l.s4 1983009808
    %v1168 = vunpack.c.0.s8 %v1167
    %v1169 = vlaneseq
    %v1170 = vshrl.u32 %v1169, 7
    %v1171 = vsub.s32 %v1168, %v1170
    %v1172 = vrot.slane %v1165, %v1171
    %v1173 = vcombine.low %v1148, %v1156
    %v1174 = vcombine.high %v1148, %v1156
    %v1176 = vunpack.c.l.s4 1934713408
    %v1177 = vunpack.c.0.s8 %v1176
    %v1178 = vlaneseq
    %v1179 = vshrl.u32 %v1178, 7
    %v1180 = vsub.s32 %v1177, %v1179
    %v1181 = vrot.slane %v1173, %v1180
    %v1183 = vunpack.c.l.s4 1934713408
    %v1184 = vunpack.c.0.s8 %v1183
    %v1185 = vlaneseq
    %v1186 = vshrl.u32 %v1185, 7
    %v1187 = vsub.s32 %v1184, %v1186
    %v1188 = vrot.slane %v1174, %v1187
    %v1189 = vcombine.low %v1164, %v1172
    %v1190 = vcombine.high %v1164, %v1172
    %v1192 = vunpack.c.l.s4 1934713408
    %v1193 = vunpack.c.0.s8 %v1192
    %v1194 = vlaneseq
    %v1195 = vshrl.u32 %v1194, 7
    %v1196 = vsub.s32 %v1193, %v1195
    %v1197 = vrot.slane %v1189, %v1196
    %v1199 = vunpack.c.l.s4 1934713408
    %v1200 = vunpack.c.0.s8 %v1199
    %v1201 = vlaneseq
    %v1202 = vshrl.u32 %v1201, 7
    %v1203 = vsub.s32 %v1200, %v1202
    %v1204 = vrot.slane %v1190, %v1203
    %v1205 = vcombine.low %v1181, %v1197
    %v1206 = vcombine.high %v1181, %v1197
    %v1207 = vcombine.low %v1188, %v1204
    %v1208 = vcombine.high %v1188, %v1204
    %v1209 = vpack.c.bf16 %v1137, %v1137
    %v1210 = vpack.c.bf16 %v1205, %v1205
    %v1211 = vpack.c.bf16 %v1138, %v1138
    %v1212 = vpack.c.bf16 %v1206, %v1206
    %v1213 = vpack.c.bf16 %v1139, %v1139
    %v1214 = vpack.c.bf16 %v1207, %v1207
    %v1215 = vpack.c.bf16 %v1140, %v1140
    %v1216 = vpack.c.bf16 %v1208, %v1208
    %vm1217 = vcmask 64512
    %v1219 = vsel %vm1217, %v609, 0
    %v1222 = vsel %vm1217, %v909, 0
    %1224 = vmatprep.subr.bf16.mxu0 0
    %1225 = vmatpush1.bf16.xpose.msra.mxu0 0
    %1226 = vmatprep.subr.bf16.mxu0 0
    %1227 = vmatpush1.bf16.xpose.msra.mxu0 0
    %1228 = vmatprep.subr.bf16.mxu0 0
    %1229 = vmatpush1.bf16.xpose.msra.mxu0 0
    %1230 = vmatprep.subr.bf16.mxu0 0
    %1231 = vmatpush1.bf16.xpose.msra.mxu0 0
    %1232 = vmatprep.subr.bf16.mxu0 0
    %1233 = vmatpush1.bf16.xpose.msra.mxu0 0
    %1234 = vmatprep.subr.bf16.mxu0 0
    %1235 = vmatpush1.bf16.xpose.msra.mxu0 0
    %1236 = vmatprep.subr.bf16.mxu0 0
    %1237 = vmatpush1.bf16.xpose.msra.mxu0 0
    %1238 = vmatprep.subr.bf16.mxu0 0
    %1239 = vmatpush1.bf16.xpose.msra.mxu0 %v1222
    %1240 = vmatprep.subr.bf16.mxu0 0
    %1241 = vmatpush2.bf16.xpose.msra.mxu0 0
    %1242 = vmatprep.subr.bf16.mxu0 0
    %1243 = vmatpush2.bf16.xpose.msra.mxu0 0
    %1244 = vmatprep.subr.bf16.mxu0 0
    %1245 = vmatpush2.bf16.xpose.msra.mxu0 0
    %1246 = vmatprep.subr.bf16.mxu0 0
    %1247 = vmatpush2.bf16.xpose.msra.mxu0 0
    %1248 = vmatprep.subr.bf16.mxu0 0
    %1249 = vmatpush2.bf16.xpose.msra.mxu0 0
    %1250 = vmatprep.subr.bf16.mxu0 0
    %1251 = vmatpush2.bf16.xpose.msra.mxu0 0
    %1252 = vmatprep.subr.bf16.mxu0 0
    %1253 = vmatpush2.bf16.xpose.msra.mxu0 0
    %1254 = vmatprep.subr.bf16.mxu0 0
    %1255 = vmatpush2.bf16.xpose.msra.mxu0 0
    %1256 = vmatprep.mubr.bf16.mxu0 0
    %1257 = vmatmul.mubr.bf16.gmra.mxu0 %v1219
    %v1258 = vpop.f32.mrf.mxu0
    %v1259 = vadd.f32 0.0, %v1258
    %v1260 = vpop.f32.mrf.mxu0
    %v1261 = vpop.f32.mrf.mxu0
    %v1262 = vpop.f32.mrf.mxu0
    %1263 = vdwg.mxu0
    %v1265 = vsel %vm1217, %v610, 0
    %v1268 = vsel %vm1217, %v910, 0
    %1270 = vmatprep.subr.bf16.mxu0 0
    %1271 = vmatpush1.bf16.xpose.msra.mxu0 0
    %1272 = vmatprep.subr.bf16.mxu0 0
    %1273 = vmatpush1.bf16.xpose.msra.mxu0 0
    %1274 = vmatprep.subr.bf16.mxu0 0
    %1275 = vmatpush1.bf16.xpose.msra.mxu0 0
    %1276 = vmatprep.subr.bf16.mxu0 0
    %1277 = vmatpush1.bf16.xpose.msra.mxu0 0
    %1278 = vmatprep.subr.bf16.mxu0 0
    %1279 = vmatpush1.bf16.xpose.msra.mxu0 0
    %1280 = vmatprep.subr.bf16.mxu0 0
    %1281 = vmatpush1.bf16.xpose.msra.mxu0 0
    %1282 = vmatprep.subr.bf16.mxu0 0
    %1283 = vmatpush1.bf16.xpose.msra.mxu0 0
    %1284 = vmatprep.subr.bf16.mxu0 0
    %1285 = vmatpush1.bf16.xpose.msra.mxu0 %v1268
    %1286 = vmatprep.subr.bf16.mxu0 0
    %1287 = vmatpush2.bf16.xpose.msra.mxu0 0
    %1288 = vmatprep.subr.bf16.mxu0 0
    %1289 = vmatpush2.bf16.xpose.msra.mxu0 0
    %1290 = vmatprep.subr.bf16.mxu0 0
    %1291 = vmatpush2.bf16.xpose.msra.mxu0 0
    %1292 = vmatprep.subr.bf16.mxu0 0
    %1293 = vmatpush2.bf16.xpose.msra.mxu0 0
    %1294 = vmatprep.subr.bf16.mxu0 0
    %1295 = vmatpush2.bf16.xpose.msra.mxu0 0
    %1296 = vmatprep.subr.bf16.mxu0 0
    %1297 = vmatpush2.bf16.xpose.msra.mxu0 0
    %1298 = vmatprep.subr.bf16.mxu0 0
    %1299 = vmatpush2.bf16.xpose.msra.mxu0 0
    %1300 = vmatprep.subr.bf16.mxu0 0
    %1301 = vmatpush2.bf16.xpose.msra.mxu0 0
    %1302 = vmatprep.mubr.bf16.mxu0 0
    %1303 = vmatmul.mubr.bf16.gmra.mxu0 %v1265
    %v1304 = vpop.f32.mrf.mxu0
    %v1305 = vadd.f32 0.0, %v1304
    %v1306 = vpop.f32.mrf.mxu0
    %v1307 = vpop.f32.mrf.mxu0
    %v1308 = vpop.f32.mrf.mxu0
    %1309 = vdwg.mxu0
    %v1311 = vsel %vm1217, %v611, 0
    %v1314 = vsel %vm1217, %v911, 0
    %1316 = vmatprep.subr.bf16.mxu0 0
    %1317 = vmatpush1.bf16.xpose.msra.mxu0 0
    %1318 = vmatprep.subr.bf16.mxu0 0
    %1319 = vmatpush1.bf16.xpose.msra.mxu0 0
    %1320 = vmatprep.subr.bf16.mxu0 0
    %1321 = vmatpush1.bf16.xpose.msra.mxu0 0
    %1322 = vmatprep.subr.bf16.mxu0 0
    %1323 = vmatpush1.bf16.xpose.msra.mxu0 0
    %1324 = vmatprep.subr.bf16.mxu0 0
    %1325 = vmatpush1.bf16.xpose.msra.mxu0 0
    %1326 = vmatprep.subr.bf16.mxu0 0
    %1327 = vmatpush1.bf16.xpose.msra.mxu0 0
    %1328 = vmatprep.subr.bf16.mxu0 0
    %1329 = vmatpush1.bf16.xpose.msra.mxu0 0
    %1330 = vmatprep.subr.bf16.mxu0 0
    %1331 = vmatpush1.bf16.xpose.msra.mxu0 %v1314
    %1332 = vmatprep.subr.bf16.mxu0 0
    %1333 = vmatpush2.bf16.xpose.msra.mxu0 0
    %1334 = vmatprep.subr.bf16.mxu0 0
    %1335 = vmatpush2.bf16.xpose.msra.mxu0 0
    %1336 = vmatprep.subr.bf16.mxu0 0
    %1337 = vmatpush2.bf16.xpose.msra.mxu0 0
    %1338 = vmatprep.subr.bf16.mxu0 0
    %1339 = vmatpush2.bf16.xpose.msra.mxu0 0
    %1340 = vmatprep.subr.bf16.mxu0 0
    %1341 = vmatpush2.bf16.xpose.msra.mxu0 0
    %1342 = vmatprep.subr.bf16.mxu0 0
    %1343 = vmatpush2.bf16.xpose.msra.mxu0 0
    %1344 = vmatprep.subr.bf16.mxu0 0
    %1345 = vmatpush2.bf16.xpose.msra.mxu0 0
    %1346 = vmatprep.subr.bf16.mxu0 0
    %1347 = vmatpush2.bf16.xpose.msra.mxu0 0
    %1348 = vmatprep.mubr.bf16.mxu0 0
    %1349 = vmatmul.mubr.bf16.gmra.mxu0 %v1311
    %v1350 = vpop.f32.mrf.mxu0
    %v1351 = vadd.f32 0.0, %v1350
    %v1352 = vpop.f32.mrf.mxu0
    %v1353 = vpop.f32.mrf.mxu0
    %v1354 = vpop.f32.mrf.mxu0
    %1355 = vdwg.mxu0
    %v1357 = vsel %vm1217, %v612, 0
    %v1360 = vsel %vm1217, %v912, 0
    %1362 = vmatprep.subr.bf16.mxu0 0
    %1363 = vmatpush1.bf16.xpose.msra.mxu0 0
    %1364 = vmatprep.subr.bf16.mxu0 0
    %1365 = vmatpush1.bf16.xpose.msra.mxu0 0
    %1366 = vmatprep.subr.bf16.mxu0 0
    %1367 = vmatpush1.bf16.xpose.msra.mxu0 0
    %1368 = vmatprep.subr.bf16.mxu0 0
    %1369 = vmatpush1.bf16.xpose.msra.mxu0 0
    %1370 = vmatprep.subr.bf16.mxu0 0
    %1371 = vmatpush1.bf16.xpose.msra.mxu0 0
    %1372 = vmatprep.subr.bf16.mxu0 0
    %1373 = vmatpush1.bf16.xpose.msra.mxu0 0
    %1374 = vmatprep.subr.bf16.mxu0 0
    %1375 = vmatpush1.bf16.xpose.msra.mxu0 0
    %1376 = vmatprep.subr.bf16.mxu0 0
    %1377 = vmatpush1.bf16.xpose.msra.mxu0 %v1360
    %1378 = vmatprep.subr.bf16.mxu0 0
    %1379 = vmatpush2.bf16.xpose.msra.mxu0 0
    %1380 = vmatprep.subr.bf16.mxu0 0
    %1381 = vmatpush2.bf16.xpose.msra.mxu0 0
    %1382 = vmatprep.subr.bf16.mxu0 0
    %1383 = vmatpush2.bf16.xpose.msra.mxu0 0
    %1384 = vmatprep.subr.bf16.mxu0 0
    %1385 = vmatpush2.bf16.xpose.msra.mxu0 0
    %1386 = vmatprep.subr.bf16.mxu0 0
    %1387 = vmatpush2.bf16.xpose.msra.mxu0 0
    %1388 = vmatprep.subr.bf16.mxu0 0
    %1389 = vmatpush2.bf16.xpose.msra.mxu0 0
    %1390 = vmatprep.subr.bf16.mxu0 0
    %1391 = vmatpush2.bf16.xpose.msra.mxu0 0
    %1392 = vmatprep.subr.bf16.mxu0 0
    %1393 = vmatpush2.bf16.xpose.msra.mxu0 0
    %1394 = vmatprep.mubr.bf16.mxu0 0
    %1395 = vmatmul.mubr.bf16.gmra.mxu0 %v1357
    %v1396 = vpop.f32.mrf.mxu0
    %v1397 = vadd.f32 0.0, %v1396
    %v1398 = vpop.f32.mrf.mxu0
    %v1399 = vpop.f32.mrf.mxu0
    %v1400 = vpop.f32.mrf.mxu0
    %1401 = vdwg.mxu0
    %v1403 = vsel %vm1217, %v613, 0
    %v1406 = vsel %vm1217, %v913, 0
    %1408 = vmatprep.subr.bf16.mxu0 0
    %1409 = vmatpush1.bf16.xpose.msra.mxu0 0
    %1410 = vmatprep.subr.bf16.mxu0 0
    %1411 = vmatpush1.bf16.xpose.msra.mxu0 0
    %1412 = vmatprep.subr.bf16.mxu0 0
    %1413 = vmatpush1.bf16.xpose.msra.mxu0 0
    %1414 = vmatprep.subr.bf16.mxu0 0
    %1415 = vmatpush1.bf16.xpose.msra.mxu0 0
    %1416 = vmatprep.subr.bf16.mxu0 0
    %1417 = vmatpush1.bf16.xpose.msra.mxu0 0
    %1418 = vmatprep.subr.bf16.mxu0 0
    %1419 = vmatpush1.bf16.xpose.msra.mxu0 0
    %1420 = vmatprep.subr.bf16.mxu0 0
    %1421 = vmatpush1.bf16.xpose.msra.mxu0 0
    %1422 = vmatprep.subr.bf16.mxu0 0
    %1423 = vmatpush1.bf16.xpose.msra.mxu0 %v1406
    %1424 = vmatprep.subr.bf16.mxu0 0
    %1425 = vmatpush2.bf16.xpose.msra.mxu0 0
    %1426 = vmatprep.subr.bf16.mxu0 0
    %1427 = vmatpush2.bf16.xpose.msra.mxu0 0
    %1428 = vmatprep.subr.bf16.mxu0 0
    %1429 = vmatpush2.bf16.xpose.msra.mxu0 0
    %1430 = vmatprep.subr.bf16.mxu0 0
    %1431 = vmatpush2.bf16.xpose.msra.mxu0 0
    %1432 = vmatprep.subr.bf16.mxu0 0
    %1433 = vmatpush2.bf16.xpose.msra.mxu0 0
    %1434 = vmatprep.subr.bf16.mxu0 0
    %1435 = vmatpush2.bf16.xpose.msra.mxu0 0
    %1436 = vmatprep.subr.bf16.mxu0 0
    %1437 = vmatpush2.bf16.xpose.msra.mxu0 0
    %1438 = vmatprep.subr.bf16.mxu0 0
    %1439 = vmatpush2.bf16.xpose.msra.mxu0 0
    %1440 = vmatprep.mubr.bf16.mxu0 0
    %1441 = vmatmul.mubr.bf16.gmra.mxu0 %v1403
    %v1442 = vpop.f32.mrf.mxu0
    %v1443 = vadd.f32 0.0, %v1442
    %v1444 = vpop.f32.mrf.mxu0
    %v1445 = vpop.f32.mrf.mxu0
    %v1446 = vpop.f32.mrf.mxu0
    %1447 = vdwg.mxu0
    %v1449 = vsel %vm1217, %v614, 0
    %v1452 = vsel %vm1217, %v914, 0
    %1454 = vmatprep.subr.bf16.mxu0 0
    %1455 = vmatpush1.bf16.xpose.msra.mxu0 0
    %1456 = vmatprep.subr.bf16.mxu0 0
    %1457 = vmatpush1.bf16.xpose.msra.mxu0 0
    %1458 = vmatprep.subr.bf16.mxu0 0
    %1459 = vmatpush1.bf16.xpose.msra.mxu0 0
    %1460 = vmatprep.subr.bf16.mxu0 0
    %1461 = vmatpush1.bf16.xpose.msra.mxu0 0
    %1462 = vmatprep.subr.bf16.mxu0 0
    %1463 = vmatpush1.bf16.xpose.msra.mxu0 0
    %1464 = vmatprep.subr.bf16.mxu0 0
    %1465 = vmatpush1.bf16.xpose.msra.mxu0 0
    %1466 = vmatprep.subr.bf16.mxu0 0
    %1467 = vmatpush1.bf16.xpose.msra.mxu0 0
    %1468 = vmatprep.subr.bf16.mxu0 0
    %1469 = vmatpush1.bf16.xpose.msra.mxu0 %v1452
    %1470 = vmatprep.subr.bf16.mxu0 0
    %1471 = vmatpush2.bf16.xpose.msra.mxu0 0
    %1472 = vmatprep.subr.bf16.mxu0 0
    %1473 = vmatpush2.bf16.xpose.msra.mxu0 0
    %1474 = vmatprep.subr.bf16.mxu0 0
    %1475 = vmatpush2.bf16.xpose.msra.mxu0 0
    %1476 = vmatprep.subr.bf16.mxu0 0
    %1477 = vmatpush2.bf16.xpose.msra.mxu0 0
    %1478 = vmatprep.subr.bf16.mxu0 0
    %1479 = vmatpush2.bf16.xpose.msra.mxu0 0
    %1480 = vmatprep.subr.bf16.mxu0 0
    %1481 = vmatpush2.bf16.xpose.msra.mxu0 0
    %1482 = vmatprep.subr.bf16.mxu0 0
    %1483 = vmatpush2.bf16.xpose.msra.mxu0 0
    %1484 = vmatprep.subr.bf16.mxu0 0
    %1485 = vmatpush2.bf16.xpose.msra.mxu0 0
    %1486 = vmatprep.mubr.bf16.mxu0 0
    %1487 = vmatmul.mubr.bf16.gmra.mxu0 %v1449
    %v1488 = vpop.f32.mrf.mxu0
    %v1489 = vadd.f32 0.0, %v1488
    %v1490 = vpop.f32.mrf.mxu0
    %v1491 = vpop.f32.mrf.mxu0
    %v1492 = vpop.f32.mrf.mxu0
    %1493 = vdwg.mxu0
    %v1495 = vsel %vm1217, %v615, 0
    %v1498 = vsel %vm1217, %v915, 0
    %1500 = vmatprep.subr.bf16.mxu0 0
    %1501 = vmatpush1.bf16.xpose.msra.mxu0 0
    %1502 = vmatprep.subr.bf16.mxu0 0
    %1503 = vmatpush1.bf16.xpose.msra.mxu0 0
    %1504 = vmatprep.subr.bf16.mxu0 0
    %1505 = vmatpush1.bf16.xpose.msra.mxu0 0
    %1506 = vmatprep.subr.bf16.mxu0 0
    %1507 = vmatpush1.bf16.xpose.msra.mxu0 0
    %1508 = vmatprep.subr.bf16.mxu0 0
    %1509 = vmatpush1.bf16.xpose.msra.mxu0 0
    %1510 = vmatprep.subr.bf16.mxu0 0
    %1511 = vmatpush1.bf16.xpose.msra.mxu0 0
    %1512 = vmatprep.subr.bf16.mxu0 0
    %1513 = vmatpush1.bf16.xpose.msra.mxu0 0
    %1514 = vmatprep.subr.bf16.mxu0 0
    %1515 = vmatpush1.bf16.xpose.msra.mxu0 %v1498
    %1516 = vmatprep.subr.bf16.mxu0 0
    %1517 = vmatpush2.bf16.xpose.msra.mxu0 0
    %1518 = vmatprep.subr.bf16.mxu0 0
    %1519 = vmatpush2.bf16.xpose.msra.mxu0 0
    %1520 = vmatprep.subr.bf16.mxu0 0
    %1521 = vmatpush2.bf16.xpose.msra.mxu0 0
    %1522 = vmatprep.subr.bf16.mxu0 0
    %1523 = vmatpush2.bf16.xpose.msra.mxu0 0
    %1524 = vmatprep.subr.bf16.mxu0 0
    %1525 = vmatpush2.bf16.xpose.msra.mxu0 0
    %1526 = vmatprep.subr.bf16.mxu0 0
    %1527 = vmatpush2.bf16.xpose.msra.mxu0 0
    %1528 = vmatprep.subr.bf16.mxu0 0
    %1529 = vmatpush2.bf16.xpose.msra.mxu0 0
    %1530 = vmatprep.subr.bf16.mxu0 0
    %1531 = vmatpush2.bf16.xpose.msra.mxu0 0
    %1532 = vmatprep.mubr.bf16.mxu0 0
    %1533 = vmatmul.mubr.bf16.gmra.mxu0 %v1495
    %v1534 = vpop.f32.mrf.mxu0
    %v1535 = vadd.f32 0.0, %v1534
    %v1536 = vpop.f32.mrf.mxu0
    %v1537 = vpop.f32.mrf.mxu0
    %v1538 = vpop.f32.mrf.mxu0
    %1539 = vdwg.mxu0
    %v1541 = vsel %vm1217, %v616, 0
    %v1544 = vsel %vm1217, %v916, 0
    %1546 = vmatprep.subr.bf16.mxu0 0
    %1547 = vmatpush1.bf16.xpose.msra.mxu0 0
    %1548 = vmatprep.subr.bf16.mxu0 0
    %1549 = vmatpush1.bf16.xpose.msra.mxu0 0
    %1550 = vmatprep.subr.bf16.mxu0 0
    %1551 = vmatpush1.bf16.xpose.msra.mxu0 0
    %1552 = vmatprep.subr.bf16.mxu0 0
    %1553 = vmatpush1.bf16.xpose.msra.mxu0 0
    %1554 = vmatprep.subr.bf16.mxu0 0
    %1555 = vmatpush1.bf16.xpose.msra.mxu0 0
    %1556 = vmatprep.subr.bf16.mxu0 0
    %1557 = vmatpush1.bf16.xpose.msra.mxu0 0
    %1558 = vmatprep.subr.bf16.mxu0 0
    %1559 = vmatpush1.bf16.xpose.msra.mxu0 0
    %1560 = vmatprep.subr.bf16.mxu0 0
    %1561 = vmatpush1.bf16.xpose.msra.mxu0 %v1544
    %1562 = vmatprep.subr.bf16.mxu0 0
    %1563 = vmatpush2.bf16.xpose.msra.mxu0 0
    %1564 = vmatprep.subr.bf16.mxu0 0
    %1565 = vmatpush2.bf16.xpose.msra.mxu0 0
    %1566 = vmatprep.subr.bf16.mxu0 0
    %1567 = vmatpush2.bf16.xpose.msra.mxu0 0
    %1568 = vmatprep.subr.bf16.mxu0 0
    %1569 = vmatpush2.bf16.xpose.msra.mxu0 0
    %1570 = vmatprep.subr.bf16.mxu0 0
    %1571 = vmatpush2.bf16.xpose.msra.mxu0 0
    %1572 = vmatprep.subr.bf16.mxu0 0
    %1573 = vmatpush2.bf16.xpose.msra.mxu0 0
    %1574 = vmatprep.subr.bf16.mxu0 0
    %1575 = vmatpush2.bf16.xpose.msra.mxu0 0
    %1576 = vmatprep.subr.bf16.mxu0 0
    %1577 = vmatpush2.bf16.xpose.msra.mxu0 0
    %1578 = vmatprep.mubr.bf16.mxu0 0
    %1579 = vmatmul.mubr.bf16.gmra.mxu0 %v1541
    %v1580 = vpop.f32.mrf.mxu0
    %v1581 = vadd.f32 0.0, %v1580
    %v1582 = vpop.f32.mrf.mxu0
    %v1583 = vpop.f32.mrf.mxu0
    %v1584 = vpop.f32.mrf.mxu0
    %1585 = vdwg.mxu0
    %v1586 = vsel %vm1217, %v1259, -inf
    %1587 = vmax.xlane.f32.xlu0 %v1586
    %v1588 = vpop.xlane.xlu0 %1587
    %v1589 = vsel %vm1217, %v1305, -inf
    %1590 = vmax.xlane.f32.xlu0 %v1589
    %v1591 = vpop.xlane.xlu0 %1590
    %v1592 = vsel %vm1217, %v1351, -inf
    %1593 = vmax.xlane.f32.xlu0 %v1592
    %v1594 = vpop.xlane.xlu0 %1593
    %v1595 = vsel %vm1217, %v1397, -inf
    %1596 = vmax.xlane.f32.xlu0 %v1595
    %v1597 = vpop.xlane.xlu0 %1596
    %v1598 = vsel %vm1217, %v1443, -inf
    %1599 = vmax.xlane.f32.xlu0 %v1598
    %v1600 = vpop.xlane.xlu0 %1599
    %v1601 = vsel %vm1217, %v1489, -inf
    %1602 = vmax.xlane.f32.xlu0 %v1601
    %v1603 = vpop.xlane.xlu0 %1602
    %v1604 = vsel %vm1217, %v1535, -inf
    %1605 = vmax.xlane.f32.xlu0 %v1604
    %v1606 = vpop.xlane.xlu0 %1605
    %v1607 = vsel %vm1217, %v1581, -inf
    %1608 = vmax.xlane.f32.xlu0 %v1607
    %v1609 = vpop.xlane.xlu0 %1608
    %v1610 = vsub.f32 %v1259, %v1588
    %v1611 = vsub.f32 %v1305, %v1591
    %v1612 = vsub.f32 %v1351, %v1594
    %v1613 = vsub.f32 %v1397, %v1597
    %v1614 = vsub.f32 %v1443, %v1600
    %v1615 = vsub.f32 %v1489, %v1603
    %v1616 = vsub.f32 %v1535, %v1606
    %v1617 = vsub.f32 %v1581, %v1609
    %v1618 = vmul.f32 %v1610, 1.442695
    %v1619 = vpow.pop %v1618
    %v1620 = vmul.f32 %v1611, 1.442695
    %v1621 = vpow.pop %v1620
    %v1622 = vmul.f32 %v1612, 1.442695
    %v1623 = vpow.pop %v1622
    %v1624 = vmul.f32 %v1613, 1.442695
    %v1625 = vpow.pop %v1624
    %v1626 = vmul.f32 %v1614, 1.442695
    %v1627 = vpow.pop %v1626
    %v1628 = vmul.f32 %v1615, 1.442695
    %v1629 = vpow.pop %v1628
    %v1630 = vmul.f32 %v1616, 1.442695
    %v1631 = vpow.pop %v1630
    %v1632 = vmul.f32 %v1617, 1.442695
    %v1633 = vpow.pop %v1632
    %v1634 = vsel %vm1217, %v1619, 0.0
    %1635 = vadd.xlane.f32.xlu0 %v1634
    %v1636 = vpop.xlane.xlu0 %1635
    %v1637 = vsel %vm1217, %v1621, 0.0
    %1638 = vadd.xlane.f32.xlu0 %v1637
    %v1639 = vpop.xlane.xlu0 %1638
    %v1640 = vsel %vm1217, %v1623, 0.0
    %1641 = vadd.xlane.f32.xlu0 %v1640
    %v1642 = vpop.xlane.xlu0 %1641
    %v1643 = vsel %vm1217, %v1625, 0.0
    %1644 = vadd.xlane.f32.xlu0 %v1643
    %v1645 = vpop.xlane.xlu0 %1644
    %v1646 = vsel %vm1217, %v1627, 0.0
    %1647 = vadd.xlane.f32.xlu0 %v1646
    %v1648 = vpop.xlane.xlu0 %1647
    %v1649 = vsel %vm1217, %v1629, 0.0
    %1650 = vadd.xlane.f32.xlu0 %v1649
    %v1651 = vpop.xlane.xlu0 %1650
    %v1652 = vsel %vm1217, %v1631, 0.0
    %1653 = vadd.xlane.f32.xlu0 %v1652
    %v1654 = vpop.xlane.xlu0 %1653
    %v1655 = vsel %vm1217, %v1633, 0.0
    %1656 = vadd.xlane.f32.xlu0 %v1655
    %v1657 = vpop.xlane.xlu0 %1656
    %v1658 = vrcp.pop %v1636
    %v1659 = vrcp.pop %v1639
    %v1660 = vrcp.pop %v1642
    %v1661 = vrcp.pop %v1645
    %v1662 = vrcp.pop %v1648
    %v1663 = vrcp.pop %v1651
    %v1664 = vrcp.pop %v1654
    %v1665 = vrcp.pop %v1657
    %v1666 = vmul.f32 %v1619, %v1658
    %v1667 = vmul.f32 %v1621, %v1659
    %v1668 = vmul.f32 %v1623, %v1660
    %v1669 = vmul.f32 %v1625, %v1661
    %v1670 = vmul.f32 %v1627, %v1662
    %v1671 = vmul.f32 %v1629, %v1663
    %v1672 = vmul.f32 %v1631, %v1664
    %v1673 = vmul.f32 %v1633, %v1665
    %v1674 = vpack.c.bf16 %v1666, %v1666
    %v1675 = vpack.c.bf16 %v1667, %v1667
    %v1676 = vpack.c.bf16 %v1668, %v1668
    %v1677 = vpack.c.bf16 %v1669, %v1669
    %v1678 = vpack.c.bf16 %v1670, %v1670
    %v1679 = vpack.c.bf16 %v1671, %v1671
    %v1680 = vpack.c.bf16 %v1672, %v1672
    %v1681 = vpack.c.bf16 %v1673, %v1673
    %v1683 = vsel %vm1217, %v1674, 0
    %vm1685 = vcmask 1043456
    %v1687 = vsel %vm1685, %v1209, 0
    %1689 = vmatprep.subr.bf16.mxu0 0
    %1690 = vmatpush1.bf16.msra.mxu0 0
    %1691 = vmatprep.subr.bf16.mxu0 0
    %1692 = vmatpush1.bf16.msra.mxu0 0
    %1693 = vmatprep.subr.bf16.mxu0 0
    %1694 = vmatpush1.bf16.msra.mxu0 0
    %1695 = vmatprep.subr.bf16.mxu0 0
    %1696 = vmatpush1.bf16.msra.mxu0 0
    %1697 = vmatprep.subr.bf16.mxu0 0
    %1698 = vmatpush1.bf16.msra.mxu0 0
    %1699 = vmatprep.subr.bf16.mxu0 0
    %1700 = vmatpush1.bf16.msra.mxu0 0
    %1701 = vmatprep.subr.bf16.mxu0 0
    %1702 = vmatpush1.bf16.msra.mxu0 0
    %1703 = vmatprep.subr.bf16.mxu0 0
    %1704 = vmatpush1.bf16.msra.mxu0 %v1687
    %1705 = vmatprep.subr.bf16.mxu0 0
    %1706 = vmatpush2.bf16.msra.mxu0 0
    %1707 = vmatprep.subr.bf16.mxu0 0
    %1708 = vmatpush2.bf16.msra.mxu0 0
    %1709 = vmatprep.subr.bf16.mxu0 0
    %1710 = vmatpush2.bf16.msra.mxu0 0
    %1711 = vmatprep.subr.bf16.mxu0 0
    %1712 = vmatpush2.bf16.msra.mxu0 0
    %1713 = vmatprep.subr.bf16.mxu0 0
    %1714 = vmatpush2.bf16.msra.mxu0 0
    %1715 = vmatprep.subr.bf16.mxu0 0
    %1716 = vmatpush2.bf16.msra.mxu0 0
    %1717 = vmatprep.subr.bf16.mxu0 0
    %1718 = vmatpush2.bf16.msra.mxu0 0
    %1719 = vmatprep.subr.bf16.mxu0 0
    %1720 = vmatpush2.bf16.msra.mxu0 0
    %1721 = vmatprep.mubr.bf16.mxu0 0
    %1722 = vmatmul.mubr.bf16.gmra.mxu0 %v1683
    %v1723 = vpop.f32.mrf.mxu0
    %v1724 = vadd.f32 0.0, %v1723
    %v1725 = vpop.f32.mrf.mxu0
    %v1726 = vpop.f32.mrf.mxu0
    %v1727 = vpop.f32.mrf.mxu0
    %1728 = vdwg.mxu0
    %v1730 = vsel %vm1217, %v1675, 0
    %v1733 = vsel %vm1685, %v1210, 0
    %1735 = vmatprep.subr.bf16.mxu0 0
    %1736 = vmatpush1.bf16.msra.mxu0 0
    %1737 = vmatprep.subr.bf16.mxu0 0
    %1738 = vmatpush1.bf16.msra.mxu0 0
    %1739 = vmatprep.subr.bf16.mxu0 0
    %1740 = vmatpush1.bf16.msra.mxu0 0
    %1741 = vmatprep.subr.bf16.mxu0 0
    %1742 = vmatpush1.bf16.msra.mxu0 0
    %1743 = vmatprep.subr.bf16.mxu0 0
    %1744 = vmatpush1.bf16.msra.mxu0 0
    %1745 = vmatprep.subr.bf16.mxu0 0
    %1746 = vmatpush1.bf16.msra.mxu0 0
    %1747 = vmatprep.subr.bf16.mxu0 0
    %1748 = vmatpush1.bf16.msra.mxu0 0
    %1749 = vmatprep.subr.bf16.mxu0 0
    %1750 = vmatpush1.bf16.msra.mxu0 %v1733
    %1751 = vmatprep.subr.bf16.mxu0 0
    %1752 = vmatpush2.bf16.msra.mxu0 0
    %1753 = vmatprep.subr.bf16.mxu0 0
    %1754 = vmatpush2.bf16.msra.mxu0 0
    %1755 = vmatprep.subr.bf16.mxu0 0
    %1756 = vmatpush2.bf16.msra.mxu0 0
    %1757 = vmatprep.subr.bf16.mxu0 0
    %1758 = vmatpush2.bf16.msra.mxu0 0
    %1759 = vmatprep.subr.bf16.mxu0 0
    %1760 = vmatpush2.bf16.msra.mxu0 0
    %1761 = vmatprep.subr.bf16.mxu0 0
    %1762 = vmatpush2.bf16.msra.mxu0 0
    %1763 = vmatprep.subr.bf16.mxu0 0
    %1764 = vmatpush2.bf16.msra.mxu0 0
    %1765 = vmatprep.subr.bf16.mxu0 0
    %1766 = vmatpush2.bf16.msra.mxu0 0
    %1767 = vmatprep.mubr.bf16.mxu0 0
    %1768 = vmatmul.mubr.bf16.gmra.mxu0 %v1730
    %v1769 = vpop.f32.mrf.mxu0
    %v1770 = vadd.f32 0.0, %v1769
    %v1771 = vpop.f32.mrf.mxu0
    %v1772 = vpop.f32.mrf.mxu0
    %v1773 = vpop.f32.mrf.mxu0
    %1774 = vdwg.mxu0
    %v1776 = vsel %vm1217, %v1676, 0
    %v1779 = vsel %vm1685, %v1211, 0
    %1781 = vmatprep.subr.bf16.mxu0 0
    %1782 = vmatpush1.bf16.msra.mxu0 0
    %1783 = vmatprep.subr.bf16.mxu0 0
    %1784 = vmatpush1.bf16.msra.mxu0 0
    %1785 = vmatprep.subr.bf16.mxu0 0
    %1786 = vmatpush1.bf16.msra.mxu0 0
    %1787 = vmatprep.subr.bf16.mxu0 0
    %1788 = vmatpush1.bf16.msra.mxu0 0
    %1789 = vmatprep.subr.bf16.mxu0 0
    %1790 = vmatpush1.bf16.msra.mxu0 0
    %1791 = vmatprep.subr.bf16.mxu0 0
    %1792 = vmatpush1.bf16.msra.mxu0 0
    %1793 = vmatprep.subr.bf16.mxu0 0
    %1794 = vmatpush1.bf16.msra.mxu0 0
    %1795 = vmatprep.subr.bf16.mxu0 0
    %1796 = vmatpush1.bf16.msra.mxu0 %v1779
    %1797 = vmatprep.subr.bf16.mxu0 0
    %1798 = vmatpush2.bf16.msra.mxu0 0
    %1799 = vmatprep.subr.bf16.mxu0 0
    %1800 = vmatpush2.bf16.msra.mxu0 0
    %1801 = vmatprep.subr.bf16.mxu0 0
    %1802 = vmatpush2.bf16.msra.mxu0 0
    %1803 = vmatprep.subr.bf16.mxu0 0
    %1804 = vmatpush2.bf16.msra.mxu0 0
    %1805 = vmatprep.subr.bf16.mxu0 0
    %1806 = vmatpush2.bf16.msra.mxu0 0
    %1807 = vmatprep.subr.bf16.mxu0 0
    %1808 = vmatpush2.bf16.msra.mxu0 0
    %1809 = vmatprep.subr.bf16.mxu0 0
    %1810 = vmatpush2.bf16.msra.mxu0 0
    %1811 = vmatprep.subr.bf16.mxu0 0
    %1812 = vmatpush2.bf16.msra.mxu0 0
    %1813 = vmatprep.mubr.bf16.mxu0 0
    %1814 = vmatmul.mubr.bf16.gmra.mxu0 %v1776
    %v1815 = vpop.f32.mrf.mxu0
    %v1816 = vadd.f32 0.0, %v1815
    %v1817 = vpop.f32.mrf.mxu0
    %v1818 = vpop.f32.mrf.mxu0
    %v1819 = vpop.f32.mrf.mxu0
    %1820 = vdwg.mxu0
    %v1822 = vsel %vm1217, %v1677, 0
    %v1825 = vsel %vm1685, %v1212, 0
    %1827 = vmatprep.subr.bf16.mxu0 0
    %1828 = vmatpush1.bf16.msra.mxu0 0
    %1829 = vmatprep.subr.bf16.mxu0 0
    %1830 = vmatpush1.bf16.msra.mxu0 0
    %1831 = vmatprep.subr.bf16.mxu0 0
    %1832 = vmatpush1.bf16.msra.mxu0 0
    %1833 = vmatprep.subr.bf16.mxu0 0
    %1834 = vmatpush1.bf16.msra.mxu0 0
    %1835 = vmatprep.subr.bf16.mxu0 0
    %1836 = vmatpush1.bf16.msra.mxu0 0
    %1837 = vmatprep.subr.bf16.mxu0 0
    %1838 = vmatpush1.bf16.msra.mxu0 0
    %1839 = vmatprep.subr.bf16.mxu0 0
    %1840 = vmatpush1.bf16.msra.mxu0 0
    %1841 = vmatprep.subr.bf16.mxu0 0
    %1842 = vmatpush1.bf16.msra.mxu0 %v1825
    %1843 = vmatprep.subr.bf16.mxu0 0
    %1844 = vmatpush2.bf16.msra.mxu0 0
    %1845 = vmatprep.subr.bf16.mxu0 0
    %1846 = vmatpush2.bf16.msra.mxu0 0
    %1847 = vmatprep.subr.bf16.mxu0 0
    %1848 = vmatpush2.bf16.msra.mxu0 0
    %1849 = vmatprep.subr.bf16.mxu0 0
    %1850 = vmatpush2.bf16.msra.mxu0 0
    %1851 = vmatprep.subr.bf16.mxu0 0
    %1852 = vmatpush2.bf16.msra.mxu0 0
    %1853 = vmatprep.subr.bf16.mxu0 0
    %1854 = vmatpush2.bf16.msra.mxu0 0
    %1855 = vmatprep.subr.bf16.mxu0 0
    %1856 = vmatpush2.bf16.msra.mxu0 0
    %1857 = vmatprep.subr.bf16.mxu0 0
    %1858 = vmatpush2.bf16.msra.mxu0 0
    %1859 = vmatprep.mubr.bf16.mxu0 0
    %1860 = vmatmul.mubr.bf16.gmra.mxu0 %v1822
    %v1861 = vpop.f32.mrf.mxu0
    %v1862 = vadd.f32 0.0, %v1861
    %v1863 = vpop.f32.mrf.mxu0
    %v1864 = vpop.f32.mrf.mxu0
    %v1865 = vpop.f32.mrf.mxu0
    %1866 = vdwg.mxu0
    %v1868 = vsel %vm1217, %v1678, 0
    %v1871 = vsel %vm1685, %v1213, 0
    %1873 = vmatprep.subr.bf16.mxu0 0
    %1874 = vmatpush1.bf16.msra.mxu0 0
    %1875 = vmatprep.subr.bf16.mxu0 0
    %1876 = vmatpush1.bf16.msra.mxu0 0
    %1877 = vmatprep.subr.bf16.mxu0 0
    %1878 = vmatpush1.bf16.msra.mxu0 0
    %1879 = vmatprep.subr.bf16.mxu0 0
    %1880 = vmatpush1.bf16.msra.mxu0 0
    %1881 = vmatprep.subr.bf16.mxu0 0
    %1882 = vmatpush1.bf16.msra.mxu0 0
    %1883 = vmatprep.subr.bf16.mxu0 0
    %1884 = vmatpush1.bf16.msra.mxu0 0
    %1885 = vmatprep.subr.bf16.mxu0 0
    %1886 = vmatpush1.bf16.msra.mxu0 0
    %1887 = vmatprep.subr.bf16.mxu0 0
    %1888 = vmatpush1.bf16.msra.mxu0 %v1871
    %1889 = vmatprep.subr.bf16.mxu0 0
    %1890 = vmatpush2.bf16.msra.mxu0 0
    %1891 = vmatprep.subr.bf16.mxu0 0
    %1892 = vmatpush2.bf16.msra.mxu0 0
    %1893 = vmatprep.subr.bf16.mxu0 0
    %1894 = vmatpush2.bf16.msra.mxu0 0
    %1895 = vmatprep.subr.bf16.mxu0 0
    %1896 = vmatpush2.bf16.msra.mxu0 0
    %1897 = vmatprep.subr.bf16.mxu0 0
    %1898 = vmatpush2.bf16.msra.mxu0 0
    %1899 = vmatprep.subr.bf16.mxu0 0
    %1900 = vmatpush2.bf16.msra.mxu0 0
    %1901 = vmatprep.subr.bf16.mxu0 0
    %1902 = vmatpush2.bf16.msra.mxu0 0
    %1903 = vmatprep.subr.bf16.mxu0 0
    %1904 = vmatpush2.bf16.msra.mxu0 0
    %1905 = vmatprep.mubr.bf16.mxu0 0
    %1906 = vmatmul.mubr.bf16.gmra.mxu0 %v1868
    %v1907 = vpop.f32.mrf.mxu0
    %v1908 = vadd.f32 0.0, %v1907
    %v1909 = vpop.f32.mrf.mxu0
    %v1910 = vpop.f32.mrf.mxu0
    %v1911 = vpop.f32.mrf.mxu0
    %1912 = vdwg.mxu0
    %v1914 = vsel %vm1217, %v1679, 0
    %v1917 = vsel %vm1685, %v1214, 0
    %1919 = vmatprep.subr.bf16.mxu0 0
    %1920 = vmatpush1.bf16.msra.mxu0 0
    %1921 = vmatprep.subr.bf16.mxu0 0
    %1922 = vmatpush1.bf16.msra.mxu0 0
    %1923 = vmatprep.subr.bf16.mxu0 0
    %1924 = vmatpush1.bf16.msra.mxu0 0
    %1925 = vmatprep.subr.bf16.mxu0 0
    %1926 = vmatpush1.bf16.msra.mxu0 0
    %1927 = vmatprep.subr.bf16.mxu0 0
    %1928 = vmatpush1.bf16.msra.mxu0 0
    %1929 = vmatprep.subr.bf16.mxu0 0
    %1930 = vmatpush1.bf16.msra.mxu0 0
    %1931 = vmatprep.subr.bf16.mxu0 0
    %1932 = vmatpush1.bf16.msra.mxu0 0
    %1933 = vmatprep.subr.bf16.mxu0 0
    %1934 = vmatpush1.bf16.msra.mxu0 %v1917
    %1935 = vmatprep.subr.bf16.mxu0 0
    %1936 = vmatpush2.bf16.msra.mxu0 0
    %1937 = vmatprep.subr.bf16.mxu0 0
    %1938 = vmatpush2.bf16.msra.mxu0 0
    %1939 = vmatprep.subr.bf16.mxu0 0
    %1940 = vmatpush2.bf16.msra.mxu0 0
    %1941 = vmatprep.subr.bf16.mxu0 0
    %1942 = vmatpush2.bf16.msra.mxu0 0
    %1943 = vmatprep.subr.bf16.mxu0 0
    %1944 = vmatpush2.bf16.msra.mxu0 0
    %1945 = vmatprep.subr.bf16.mxu0 0
    %1946 = vmatpush2.bf16.msra.mxu0 0
    %1947 = vmatprep.subr.bf16.mxu0 0
    %1948 = vmatpush2.bf16.msra.mxu0 0
    %1949 = vmatprep.subr.bf16.mxu0 0
    %1950 = vmatpush2.bf16.msra.mxu0 0
    %1951 = vmatprep.mubr.bf16.mxu0 0
    %1952 = vmatmul.mubr.bf16.gmra.mxu0 %v1914
    %v1953 = vpop.f32.mrf.mxu0
    %v1954 = vadd.f32 0.0, %v1953
    %v1955 = vpop.f32.mrf.mxu0
    %v1956 = vpop.f32.mrf.mxu0
    %v1957 = vpop.f32.mrf.mxu0
    %1958 = vdwg.mxu0
    %v1960 = vsel %vm1217, %v1680, 0
    %v1963 = vsel %vm1685, %v1215, 0
    %1965 = vmatprep.subr.bf16.mxu0 0
    %1966 = vmatpush1.bf16.msra.mxu0 0
    %1967 = vmatprep.subr.bf16.mxu0 0
    %1968 = vmatpush1.bf16.msra.mxu0 0
    %1969 = vmatprep.subr.bf16.mxu0 0
    %1970 = vmatpush1.bf16.msra.mxu0 0
    %1971 = vmatprep.subr.bf16.mxu0 0
    %1972 = vmatpush1.bf16.msra.mxu0 0
    %1973 = vmatprep.subr.bf16.mxu0 0
    %1974 = vmatpush1.bf16.msra.mxu0 0
    %1975 = vmatprep.subr.bf16.mxu0 0
    %1976 = vmatpush1.bf16.msra.mxu0 0
    %1977 = vmatprep.subr.bf16.mxu0 0
    %1978 = vmatpush1.bf16.msra.mxu0 0
    %1979 = vmatprep.subr.bf16.mxu0 0
    %1980 = vmatpush1.bf16.msra.mxu0 %v1963
    %1981 = vmatprep.subr.bf16.mxu0 0
    %1982 = vmatpush2.bf16.msra.mxu0 0
    %1983 = vmatprep.subr.bf16.mxu0 0
    %1984 = vmatpush2.bf16.msra.mxu0 0
    %1985 = vmatprep.subr.bf16.mxu0 0
    %1986 = vmatpush2.bf16.msra.mxu0 0
    %1987 = vmatprep.subr.bf16.mxu0 0
    %1988 = vmatpush2.bf16.msra.mxu0 0
    %1989 = vmatprep.subr.bf16.mxu0 0
    %1990 = vmatpush2.bf16.msra.mxu0 0
    %1991 = vmatprep.subr.bf16.mxu0 0
    %1992 = vmatpush2.bf16.msra.mxu0 0
    %1993 = vmatprep.subr.bf16.mxu0 0
    %1994 = vmatpush2.bf16.msra.mxu0 0
    %1995 = vmatprep.subr.bf16.mxu0 0
    %1996 = vmatpush2.bf16.msra.mxu0 0
    %1997 = vmatprep.mubr.bf16.mxu0 0
    %1998 = vmatmul.mubr.bf16.gmra.mxu0 %v1960
    %v1999 = vpop.f32.mrf.mxu0
    %v2000 = vadd.f32 0.0, %v1999
    %v2001 = vpop.f32.mrf.mxu0
    %v2002 = vpop.f32.mrf.mxu0
    %v2003 = vpop.f32.mrf.mxu0
    %2004 = vdwg.mxu0
    %v2006 = vsel %vm1217, %v1681, 0
    %v2009 = vsel %vm1685, %v1216, 0
    %2011 = vmatprep.subr.bf16.mxu0 0
    %2012 = vmatpush1.bf16.msra.mxu0 0
    %2013 = vmatprep.subr.bf16.mxu0 0
    %2014 = vmatpush1.bf16.msra.mxu0 0
    %2015 = vmatprep.subr.bf16.mxu0 0
    %2016 = vmatpush1.bf16.msra.mxu0 0
    %2017 = vmatprep.subr.bf16.mxu0 0
    %2018 = vmatpush1.bf16.msra.mxu0 0
    %2019 = vmatprep.subr.bf16.mxu0 0
    %2020 = vmatpush1.bf16.msra.mxu0 0
    %2021 = vmatprep.subr.bf16.mxu0 0
    %2022 = vmatpush1.bf16.msra.mxu0 0
    %2023 = vmatprep.subr.bf16.mxu0 0
    %2024 = vmatpush1.bf16.msra.mxu0 0
    %2025 = vmatprep.subr.bf16.mxu0 0
    %2026 = vmatpush1.bf16.msra.mxu0 %v2009
    %2027 = vmatprep.subr.bf16.mxu0 0
    %2028 = vmatpush2.bf16.msra.mxu0 0
    %2029 = vmatprep.subr.bf16.mxu0 0
    %2030 = vmatpush2.bf16.msra.mxu0 0
    %2031 = vmatprep.subr.bf16.mxu0 0
    %2032 = vmatpush2.bf16.msra.mxu0 0
    %2033 = vmatprep.subr.bf16.mxu0 0
    %2034 = vmatpush2.bf16.msra.mxu0 0
    %2035 = vmatprep.subr.bf16.mxu0 0
    %2036 = vmatpush2.bf16.msra.mxu0 0
    %2037 = vmatprep.subr.bf16.mxu0 0
    %2038 = vmatpush2.bf16.msra.mxu0 0
    %2039 = vmatprep.subr.bf16.mxu0 0
    %2040 = vmatpush2.bf16.msra.mxu0 0
    %2041 = vmatprep.subr.bf16.mxu0 0
    %2042 = vmatpush2.bf16.msra.mxu0 0
    %2043 = vmatprep.mubr.bf16.mxu0 0
    %2044 = vmatmul.mubr.bf16.gmra.mxu0 %v2006
    %v2045 = vpop.f32.mrf.mxu0
    %v2046 = vadd.f32 0.0, %v2045
    %v2047 = vpop.f32.mrf.mxu0
    %v2048 = vpop.f32.mrf.mxu0
    %v2049 = vpop.f32.mrf.mxu0
    %2050 = vdwg.mxu0
    %v2051 = vcombine.low %v1724, %v1908
    %v2052 = vcombine.high %v1724, %v1908
    %v2054 = vunpack.c.l.s4 1983009808
    %v2055 = vunpack.c.0.s8 %v2054
    %v2056 = vlaneseq
    %v2057 = vshrl.u32 %v2056, 7
    %v2058 = vsub.s32 %v2055, %v2057
    %v2059 = vrot.slane %v2051, %v2058
    %v2061 = vunpack.c.l.s4 1983009808
    %v2062 = vunpack.c.0.s8 %v2061
    %v2063 = vlaneseq
    %v2064 = vshrl.u32 %v2063, 7
    %v2065 = vsub.s32 %v2062, %v2064
    %v2066 = vrot.slane %v2052, %v2065
    %v2067 = vcombine.low %v1816, %v2000
    %v2068 = vcombine.high %v1816, %v2000
    %v2070 = vunpack.c.l.s4 1983009808
    %v2071 = vunpack.c.0.s8 %v2070
    %v2072 = vlaneseq
    %v2073 = vshrl.u32 %v2072, 7
    %v2074 = vsub.s32 %v2071, %v2073
    %v2075 = vrot.slane %v2067, %v2074
    %v2077 = vunpack.c.l.s4 1983009808
    %v2078 = vunpack.c.0.s8 %v2077
    %v2079 = vlaneseq
    %v2080 = vshrl.u32 %v2079, 7
    %v2081 = vsub.s32 %v2078, %v2080
    %v2082 = vrot.slane %v2068, %v2081
    %v2083 = vcombine.low %v2059, %v2075
    %v2084 = vcombine.high %v2059, %v2075
    %v2086 = vunpack.c.l.s4 1934713408
    %v2087 = vunpack.c.0.s8 %v2086
    %v2088 = vlaneseq
    %v2089 = vshrl.u32 %v2088, 7
    %v2090 = vsub.s32 %v2087, %v2089
    %v2091 = vrot.slane %v2083, %v2090
    %v2093 = vunpack.c.l.s4 1934713408
    %v2094 = vunpack.c.0.s8 %v2093
    %v2095 = vlaneseq
    %v2096 = vshrl.u32 %v2095, 7
    %v2097 = vsub.s32 %v2094, %v2096
    %v2098 = vrot.slane %v2084, %v2097
    %v2099 = vcombine.low %v2066, %v2082
    %v2100 = vcombine.high %v2066, %v2082
    %v2102 = vunpack.c.l.s4 1934713408
    %v2103 = vunpack.c.0.s8 %v2102
    %v2104 = vlaneseq
    %v2105 = vshrl.u32 %v2104, 7
    %v2106 = vsub.s32 %v2103, %v2105
    %v2107 = vrot.slane %v2099, %v2106
    %v2109 = vunpack.c.l.s4 1934713408
    %v2110 = vunpack.c.0.s8 %v2109
    %v2111 = vlaneseq
    %v2112 = vshrl.u32 %v2111, 7
    %v2113 = vsub.s32 %v2110, %v2112
    %v2114 = vrot.slane %v2100, %v2113
    %v2115 = vcombine.high %v2091, 0.0
    %v2116 = vcombine.high %v2098, 0.0
    %v2117 = vcombine.high %v2107, 0.0
    %v2118 = vcombine.high %v2114, 0.0
    %v2119 = vcombine.low %v1770, %v1954
    %v2120 = vcombine.high %v1770, %v1954
    %v2122 = vunpack.c.l.s4 1983009808
    %v2123 = vunpack.c.0.s8 %v2122
    %v2124 = vlaneseq
    %v2125 = vshrl.u32 %v2124, 7
    %v2126 = vsub.s32 %v2123, %v2125
    %v2127 = vrot.slane %v2119, %v2126
    %v2129 = vunpack.c.l.s4 1983009808
    %v2130 = vunpack.c.0.s8 %v2129
    %v2131 = vlaneseq
    %v2132 = vshrl.u32 %v2131, 7
    %v2133 = vsub.s32 %v2130, %v2132
    %v2134 = vrot.slane %v2120, %v2133
    %v2135 = vcombine.low %v1862, %v2046
    %v2136 = vcombine.high %v1862, %v2046
    %v2138 = vunpack.c.l.s4 1983009808
    %v2139 = vunpack.c.0.s8 %v2138
    %v2140 = vlaneseq
    %v2141 = vshrl.u32 %v2140, 7
    %v2142 = vsub.s32 %v2139, %v2141
    %v2143 = vrot.slane %v2135, %v2142
    %v2145 = vunpack.c.l.s4 1983009808
    %v2146 = vunpack.c.0.s8 %v2145
    %v2147 = vlaneseq
    %v2148 = vshrl.u32 %v2147, 7
    %v2149 = vsub.s32 %v2146, %v2148
    %v2150 = vrot.slane %v2136, %v2149
    %v2151 = vcombine.low %v2127, %v2143
    %v2152 = vcombine.high %v2127, %v2143
    %v2154 = vunpack.c.l.s4 1934713408
    %v2155 = vunpack.c.0.s8 %v2154
    %v2156 = vlaneseq
    %v2157 = vshrl.u32 %v2156, 7
    %v2158 = vsub.s32 %v2155, %v2157
    %v2159 = vrot.slane %v2151, %v2158
    %v2161 = vunpack.c.l.s4 1934713408
    %v2162 = vunpack.c.0.s8 %v2161
    %v2163 = vlaneseq
    %v2164 = vshrl.u32 %v2163, 7
    %v2165 = vsub.s32 %v2162, %v2164
    %v2166 = vrot.slane %v2152, %v2165
    %v2167 = vcombine.low %v2134, %v2150
    %v2168 = vcombine.high %v2134, %v2150
    %v2170 = vunpack.c.l.s4 1934713408
    %v2171 = vunpack.c.0.s8 %v2170
    %v2172 = vlaneseq
    %v2173 = vshrl.u32 %v2172, 7
    %v2174 = vsub.s32 %v2171, %v2173
    %v2175 = vrot.slane %v2167, %v2174
    %v2177 = vunpack.c.l.s4 1934713408
    %v2178 = vunpack.c.0.s8 %v2177
    %v2179 = vlaneseq
    %v2180 = vshrl.u32 %v2179, 7
    %v2181 = vsub.s32 %v2178, %v2180
    %v2182 = vrot.slane %v2168, %v2181
    %v2183 = vcombine.high %v2159, 0.0
    %v2184 = vcombine.high %v2166, 0.0
    %v2185 = vcombine.high %v2175, 0.0
    %v2186 = vcombine.high %v2182, 0.0
    %v2187 = vcombine.low %v2091, %v2098
    %v2189 = vunpack.c.l.s4 1983009808
    %v2190 = vunpack.c.0.s8 %v2189
    %v2191 = vlaneseq
    %v2192 = vshrl.u32 %v2191, 7
    %v2193 = vsub.s32 %v2190, %v2192
    %v2194 = vrot.slane %v2187, %v2193
    %v2195 = vcombine.low %v2115, %v2116
    %v2197 = vunpack.c.l.s4 1983009808
    %v2198 = vunpack.c.0.s8 %v2197
    %v2199 = vlaneseq
    %v2200 = vshrl.u32 %v2199, 7
    %v2201 = vsub.s32 %v2198, %v2200
    %v2202 = vrot.slane %v2195, %v2201
    %v2203 = vcombine.low %v2107, %v2114
    %v2205 = vunpack.c.l.s4 1983009808
    %v2206 = vunpack.c.0.s8 %v2205
    %v2207 = vlaneseq
    %v2208 = vshrl.u32 %v2207, 7
    %v2209 = vsub.s32 %v2206, %v2208
    %v2210 = vrot.slane %v2203, %v2209
    %v2211 = vcombine.low %v2117, %v2118
    %v2213 = vunpack.c.l.s4 1983009808
    %v2214 = vunpack.c.0.s8 %v2213
    %v2215 = vlaneseq
    %v2216 = vshrl.u32 %v2215, 7
    %v2217 = vsub.s32 %v2214, %v2216
    %v2218 = vrot.slane %v2211, %v2217
    %v2219 = vcombine.low %v2194, %v2202
    %v2220 = vcombine.high %v2194, %v2202
    %v2222 = vunpack.c.l.s4 1934713408
    %v2223 = vunpack.c.0.s8 %v2222
    %v2224 = vlaneseq
    %v2225 = vshrl.u32 %v2224, 7
    %v2226 = vsub.s32 %v2223, %v2225
    %v2227 = vrot.slane %v2219, %v2226
    %v2229 = vunpack.c.l.s4 1934713408
    %v2230 = vunpack.c.0.s8 %v2229
    %v2231 = vlaneseq
    %v2232 = vshrl.u32 %v2231, 7
    %v2233 = vsub.s32 %v2230, %v2232
    %v2234 = vrot.slane %v2220, %v2233
    %v2235 = vcombine.low %v2210, %v2218
    %v2236 = vcombine.high %v2210, %v2218
    %v2238 = vunpack.c.l.s4 1934713408
    %v2239 = vunpack.c.0.s8 %v2238
    %v2240 = vlaneseq
    %v2241 = vshrl.u32 %v2240, 7
    %v2242 = vsub.s32 %v2239, %v2241
    %v2243 = vrot.slane %v2235, %v2242
    %v2245 = vunpack.c.l.s4 1934713408
    %v2246 = vunpack.c.0.s8 %v2245
    %v2247 = vlaneseq
    %v2248 = vshrl.u32 %v2247, 7
    %v2249 = vsub.s32 %v2246, %v2248
    %v2250 = vrot.slane %v2236, %v2249
    %v2251 = vcombine.low %v2227, %v2243
    %v2252 = vcombine.high %v2227, %v2243
    %v2253 = vcombine.low %v2234, %v2250
    %v2254 = vcombine.high %v2234, %v2250
    %v2255 = vcombine.low %v2159, %v2166
    %v2257 = vunpack.c.l.s4 1983009808
    %v2258 = vunpack.c.0.s8 %v2257
    %v2259 = vlaneseq
    %v2260 = vshrl.u32 %v2259, 7
    %v2261 = vsub.s32 %v2258, %v2260
    %v2262 = vrot.slane %v2255, %v2261
    %v2263 = vcombine.low %v2183, %v2184
    %v2265 = vunpack.c.l.s4 1983009808
    %v2266 = vunpack.c.0.s8 %v2265
    %v2267 = vlaneseq
    %v2268 = vshrl.u32 %v2267, 7
    %v2269 = vsub.s32 %v2266, %v2268
    %v2270 = vrot.slane %v2263, %v2269
    %v2271 = vcombine.low %v2175, %v2182
    %v2273 = vunpack.c.l.s4 1983009808
    %v2274 = vunpack.c.0.s8 %v2273
    %v2275 = vlaneseq
    %v2276 = vshrl.u32 %v2275, 7
    %v2277 = vsub.s32 %v2274, %v2276
    %v2278 = vrot.slane %v2271, %v2277
    %v2279 = vcombine.low %v2185, %v2186
    %v2281 = vunpack.c.l.s4 1983009808
    %v2282 = vunpack.c.0.s8 %v2281
    %v2283 = vlaneseq
    %v2284 = vshrl.u32 %v2283, 7
    %v2285 = vsub.s32 %v2282, %v2284
    %v2286 = vrot.slane %v2279, %v2285
    %v2287 = vcombine.low %v2262, %v2270
    %v2288 = vcombine.high %v2262, %v2270
    %v2290 = vunpack.c.l.s4 1934713408
    %v2291 = vunpack.c.0.s8 %v2290
    %v2292 = vlaneseq
    %v2293 = vshrl.u32 %v2292, 7
    %v2294 = vsub.s32 %v2291, %v2293
    %v2295 = vrot.slane %v2287, %v2294
    %v2297 = vunpack.c.l.s4 1934713408
    %v2298 = vunpack.c.0.s8 %v2297
    %v2299 = vlaneseq
    %v2300 = vshrl.u32 %v2299, 7
    %v2301 = vsub.s32 %v2298, %v2300
    %v2302 = vrot.slane %v2288, %v2301
    %v2303 = vcombine.low %v2278, %v2286
    %v2304 = vcombine.high %v2278, %v2286
    %v2306 = vunpack.c.l.s4 1934713408
    %v2307 = vunpack.c.0.s8 %v2306
    %v2308 = vlaneseq
    %v2309 = vshrl.u32 %v2308, 7
    %v2310 = vsub.s32 %v2307, %v2309
    %v2311 = vrot.slane %v2303, %v2310
    %v2313 = vunpack.c.l.s4 1934713408
    %v2314 = vunpack.c.0.s8 %v2313
    %v2315 = vlaneseq
    %v2316 = vshrl.u32 %v2315, 7
    %v2317 = vsub.s32 %v2314, %v2316
    %v2318 = vrot.slane %v2304, %v2317
    %v2319 = vcombine.low %v2295, %v2311
    %v2320 = vcombine.high %v2295, %v2311
    %v2321 = vcombine.low %v2302, %v2318
    %v2322 = vcombine.high %v2302, %v2318
    %2325 = vrot.lane.b32.xlu0 %v2252, 8
    %v2326 = vpop.permute.xlu0 %2325
    %2327 = vrot.lane.b32.xlu0 %v2320, 8
    %v2328 = vpop.permute.xlu0 %2327
    %2333 = vrot.lane.b32.xlu0 %v2253, 16
    %v2334 = vpop.permute.xlu0 %2333
    %2335 = vrot.lane.b32.xlu0 %v2321, 16
    %v2336 = vpop.permute.xlu0 %2335
    %2341 = vrot.lane.b32.xlu0 %v2254, 24
    %v2342 = vpop.permute.xlu0 %2341
    %2343 = vrot.lane.b32.xlu0 %v2322, 24
    %v2344 = vpop.permute.xlu0 %2343
    %v2347 = vsel %vm1217, %v2251, %v2326
    %v2348 = vsel %vm1217, %v2319, %v2328
    %vm2349 = vcmask 130048
    %v2350 = vsel %vm2349, %v2347, %v2334
    %v2351 = vsel %vm2349, %v2348, %v2336
    %vm2352 = vcmask 195584
    %v2353 = vsel %vm2352, %v2350, %v2342
    %v2354 = vsel %vm2352, %v2351, %v2344
    %v2355 = vpack.c.bf16 %v2354, %v2353
    %v2356 = vld [vmem:[%s7] sm:$0xf]
    %v2357 = vld [vmem:[%s7 + $0x4] sm:$0xf]
    %v2358 = vld [vmem:[%s7 + $0x8] sm:$0xf]
    %v2359 = vld [vmem:[%s7 + $0xc] sm:$0xf]
    %v2360 = vld [vmem:[#allocation8] sm:$0x1]
    %v2362 = vlaneseq
    %v2363 = vshrl.u32 %v2362, 7
    %v2364 = vsub.s32 0, %v2363
    %v2365 = vrot.slane %v2360, %v2364
    %v2371 = vunpack.c.l.b16 %v2356
    %v2372 = vunpack.c.l.b16 %v2357
    %v2373 = vunpack.c.l.b16 %v2358
    %v2374 = vunpack.c.l.b16 %v2359
    %v2375 = vpack.c.b16 %v2372, %v2371
    %v2376 = vpack.c.b16 %v2374, %v2373
    %v2380 = vsel %vm142, %v2355, 0
    %2382 = vmatprep.subr.bf16.mxu0 0
    %2383 = vmatpush1.bf16.msra.mxu0 0
    %2384 = vmatprep.subr.bf16.mxu0 0
    %2385 = vmatpush1.bf16.msra.mxu0 0
    %2386 = vmatprep.subr.bf16.mxu0 0
    %2387 = vmatpush1.bf16.msra.mxu0 0
    %2388 = vmatprep.subr.bf16.mxu0 0
    %2389 = vmatpush1.bf16.msra.mxu0 0
    %2390 = vmatprep.subr.bf16.mxu0 0
    %2391 = vmatpush1.bf16.msra.mxu0 0
    %2392 = vmatprep.subr.bf16.mxu0 0
    %2393 = vmatpush1.bf16.msra.mxu0 0
    %2394 = vmatprep.subr.bf16.mxu0 0
    %2395 = vmatpush1.bf16.msra.mxu0 %v2376
    %2396 = vmatprep.subr.bf16.mxu0 0
    %2397 = vmatpush1.bf16.msra.mxu0 %v2375
    %2398 = vmatprep.subr.bf16.mxu0 0
    %2399 = vmatpush2.bf16.msra.mxu0 0
    %2400 = vmatprep.subr.bf16.mxu0 0
    %2401 = vmatpush2.bf16.msra.mxu0 0
    %2402 = vmatprep.subr.bf16.mxu0 0
    %2403 = vmatpush2.bf16.msra.mxu0 0
    %2404 = vmatprep.subr.bf16.mxu0 0
    %2405 = vmatpush2.bf16.msra.mxu0 0
    %2406 = vmatprep.subr.bf16.mxu0 0
    %2407 = vmatpush2.bf16.msra.mxu0 0
    %2408 = vmatprep.subr.bf16.mxu0 0
    %2409 = vmatpush2.bf16.msra.mxu0 0
    %2410 = vmatprep.subr.bf16.mxu0 0
    %2411 = vmatpush2.bf16.msra.mxu0 0
    %2412 = vmatprep.subr.bf16.mxu0 0
    %2413 = vmatpush2.bf16.msra.mxu0 0
    %2414 = vmatprep.mubr.bf16.mxu0 0
    %2415 = vmatmul.mubr.bf16.gmra.mxu0 %v2380
    %v2416 = vpop.f32.mrf.mxu0
    %v2417 = vadd.f32 %v2365, %v2416
    %v2418 = vpop.f32.mrf.mxu0
    %v2419 = vpop.f32.mrf.mxu0
    %v2420 = vadd.f32 %v2365, %v2419
    %v2421 = vpop.f32.mrf.mxu0
    %2422 = vdwg.mxu0
    %v2423 = vadd.f32 %v116, %v2417
    %v2424 = vadd.f32 %v117, %v2420
    %v2425 = vld [vmem:[#allocation10] sm:$0x1]
    %v2426 = vld [vmem:[%s10] sm:$0x1]
    %v2427 = vsel %vm142, %v2423, 0.0
    %2428 = vadd.xlane.f32.xlu0 %v2427
    %v2429 = vpop.xlane.xlu0 %2428
    %v2430 = vsel %vm142, %v2424, 0.0
    %2431 = vadd.xlane.f32.xlu0 %v2430
    %v2432 = vpop.xlane.xlu0 %2431
    %v2433 = vrcp.pop 32.0
    %v2434 = vmul.f32 %v2429, %v2433
    %v2435 = vmul.f32 %v2432, %v2433
    %v2436 = vsub.f32 %v2423, %v2434
    %v2437 = vsub.f32 %v2424, %v2435
    %v2438 = vmul.f32 %v2436, %v2436
    %v2439 = vmul.f32 %v2437, %v2437
    %v2440 = vsel %vm142, %v2438, 0.0
    %2441 = vadd.xlane.f32.xlu0 %v2440
    %v2442 = vpop.xlane.xlu0 %2441
    %v2443 = vsel %vm142, %v2439, 0.0
    %2444 = vadd.xlane.f32.xlu0 %v2443
    %v2445 = vpop.xlane.xlu0 %2444
    %v2446 = vmul.f32 %v2442, %v2433
    %v2447 = vmul.f32 %v2445, %v2433
    %v2448 = vadd.f32 %v2446, 1e-05
    %v2449 = vadd.f32 %v2447, 1e-05
    %v2450 = vrsqrt.pop %v2448
    %v2451 = vrsqrt.pop %v2449
    %v2452 = vmul.f32 %v2436, %v2450
    %v2453 = vmul.f32 %v2437, %v2451
    %v2455 = vlaneseq
    %v2456 = vshrl.u32 %v2455, 7
    %v2457 = vsub.s32 0, %v2456
    %v2458 = vrot.slane %v2425, %v2457
    %v2460 = vmul.f32 %v2452, %v2458
    %v2461 = vmul.f32 %v2453, %v2458
    %v2463 = vlaneseq
    %v2464 = vshrl.u32 %v2463, 7
    %v2465 = vsub.s32 0, %v2464
    %v2466 = vrot.slane %v2426, %v2465
    %v2468 = vadd.f32 %v2460, %v2466
    %v2469 = vadd.f32 %v2461, %v2466
    %v2470 = vpack.c.bf16 %v2469, %v2468
    %v2471 = vld [vmem:[%s11] sm:$0xf]
    %v2472 = vld [vmem:[%s11 + $0x4] sm:$0xf]
    %v2473 = vld [vmem:[%s11 + $0x8] sm:$0xf]
    %v2474 = vld [vmem:[%s11 + $0xc] sm:$0xf]
    %v2475 = vld [vmem:[%s12] sm:$0x1]
    %v2477 = vlaneseq
    %v2478 = vshrl.u32 %v2477, 7
    %v2479 = vsub.s32 0, %v2478
    %v2480 = vrot.slane %v2475, %v2479
    %v2486 = vunpack.c.l.b16 %v2471
    %v2487 = vunpack.c.l.b16 %v2472
    %v2488 = vunpack.c.l.b16 %v2473
    %v2489 = vunpack.c.l.b16 %v2474
    %v2490 = vpack.c.b16 %v2487, %v2486
    %v2491 = vpack.c.b16 %v2489, %v2488
    %v2495 = vsel %vm142, %v2470, 0
    %2497 = vmatprep.subr.bf16.mxu0 0
    %2498 = vmatpush1.bf16.msra.mxu0 0
    %2499 = vmatprep.subr.bf16.mxu0 0
    %2500 = vmatpush1.bf16.msra.mxu0 0
    %2501 = vmatprep.subr.bf16.mxu0 0
    %2502 = vmatpush1.bf16.msra.mxu0 0
    %2503 = vmatprep.subr.bf16.mxu0 0
    %2504 = vmatpush1.bf16.msra.mxu0 0
    %2505 = vmatprep.subr.bf16.mxu0 0
    %2506 = vmatpush1.bf16.msra.mxu0 0
    %2507 = vmatprep.subr.bf16.mxu0 0
    %2508 = vmatpush1.bf16.msra.mxu0 0
    %2509 = vmatprep.subr.bf16.mxu0 0
    %2510 = vmatpush1.bf16.msra.mxu0 %v2491
    %2511 = vmatprep.subr.bf16.mxu0 0
    %2512 = vmatpush1.bf16.msra.mxu0 %v2490
    %2513 = vmatprep.subr.bf16.mxu0 0
    %2514 = vmatpush2.bf16.msra.mxu0 0
    %2515 = vmatprep.subr.bf16.mxu0 0
    %2516 = vmatpush2.bf16.msra.mxu0 0
    %2517 = vmatprep.subr.bf16.mxu0 0
    %2518 = vmatpush2.bf16.msra.mxu0 0
    %2519 = vmatprep.subr.bf16.mxu0 0
    %2520 = vmatpush2.bf16.msra.mxu0 0
    %2521 = vmatprep.subr.bf16.mxu0 0
    %2522 = vmatpush2.bf16.msra.mxu0 0
    %2523 = vmatprep.subr.bf16.mxu0 0
    %2524 = vmatpush2.bf16.msra.mxu0 0
    %2525 = vmatprep.subr.bf16.mxu0 0
    %2526 = vmatpush2.bf16.msra.mxu0 0
    %2527 = vmatprep.subr.bf16.mxu0 0
    %2528 = vmatpush2.bf16.msra.mxu0 0
    %2529 = vmatprep.mubr.bf16.mxu0 0
    %2530 = vmatmul.mubr.bf16.gmra.mxu0 %v2495
    %v2531 = vpop.f32.mrf.mxu0
    %v2532 = vadd.f32 %v2480, %v2531
    %v2533 = vpop.f32.mrf.mxu0
    %v2534 = vpop.f32.mrf.mxu0
    %v2535 = vadd.f32 %v2480, %v2534
    %v2536 = vpop.f32.mrf.mxu0
    %2537 = vdwg.mxu0
    %v2538 = vmax.f32 %v2532, 0.0
    %v2539 = vmax.f32 %v2535, 0.0
    %v2540 = vpack.c.bf16 %v2539, %v2538
    %v2541 = vld [vmem:[%s13] sm:$0xf]
    %v2542 = vld [vmem:[%s13 + $0x4] sm:$0xf]
    %v2543 = vld [vmem:[%s13 + $0x8] sm:$0xf]
    %v2544 = vld [vmem:[%s13 + $0xc] sm:$0xf]
    %v2545 = vld [vmem:[%s13 + $0x10] sm:$0xf]
    %v2546 = vld [vmem:[%s13 + $0x14] sm:$0xf]
    %v2547 = vld [vmem:[%s13 + $0x18] sm:$0xf]
    %v2548 = vld [vmem:[%s13 + $0x1c] sm:$0xf]
    %v2549 = vld [vmem:[%s13 + $0x20] sm:$0xf]
    %v2550 = vld [vmem:[%s13 + $0x24] sm:$0xf]
    %v2551 = vld [vmem:[%s13 + $0x28] sm:$0xf]
    %v2552 = vld [vmem:[%s13 + $0x2c] sm:$0xf]
    %v2553 = vld [vmem:[%s13 + $0x30] sm:$0xf]
    %v2554 = vld [vmem:[%s13 + $0x34] sm:$0xf]
    %v2555 = vld [vmem:[%s13 + $0x38] sm:$0xf]
    %v2556 = vld [vmem:[%s13 + $0x3c] sm:$0xf]
    %v2557 = vld [vmem:[%s14] sm:$0x1]
    %v2559 = vlaneseq
    %v2560 = vshrl.u32 %v2559, 7
    %v2561 = vsub.s32 0, %v2560
    %v2562 = vrot.slane %v2557, %v2561
    %v2580 = vunpack.c.l.b16 %v2541
    %v2581 = vunpack.c.l.b16 %v2542
    %v2582 = vunpack.c.l.b16 %v2543
    %v2583 = vunpack.c.l.b16 %v2544
    %v2584 = vunpack.c.l.b16 %v2545
    %v2585 = vunpack.c.l.b16 %v2546
    %v2586 = vunpack.c.l.b16 %v2547
    %v2587 = vunpack.c.l.b16 %v2548
    %v2588 = vunpack.c.l.b16 %v2549
    %v2589 = vunpack.c.l.b16 %v2550
    %v2590 = vunpack.c.l.b16 %v2551
    %v2591 = vunpack.c.l.b16 %v2552
    %v2592 = vunpack.c.l.b16 %v2553
    %v2593 = vunpack.c.l.b16 %v2554
    %v2594 = vunpack.c.l.b16 %v2555
    %v2595 = vunpack.c.l.b16 %v2556
    %v2596 = vpack.c.b16 %v2581, %v2580
    %v2597 = vpack.c.b16 %v2583, %v2582
    %v2598 = vpack.c.b16 %v2585, %v2584
    %v2599 = vpack.c.b16 %v2587, %v2586
    %v2600 = vpack.c.b16 %v2589, %v2588
    %v2601 = vpack.c.b16 %v2591, %v2590
    %v2602 = vpack.c.b16 %v2593, %v2592
    %v2603 = vpack.c.b16 %v2595, %v2594
    %2612 = vmatprep.subr.bf16.mxu0 0
    %2613 = vmatpush1.bf16.msra.mxu0 %v2603
    %2614 = vmatprep.subr.bf16.mxu0 0
    %2615 = vmatpush1.bf16.msra.mxu0 %v2602
    %2616 = vmatprep.subr.bf16.mxu0 0
    %2617 = vmatpush1.bf16.msra.mxu0 %v2601
    %2618 = vmatprep.subr.bf16.mxu0 0
    %2619 = vmatpush1.bf16.msra.mxu0 %v2600
    %2620 = vmatprep.subr.bf16.mxu0 0
    %2621 = vmatpush1.bf16.msra.mxu0 %v2599
    %2622 = vmatprep.subr.bf16.mxu0 0
    %2623 = vmatpush1.bf16.msra.mxu0 %v2598
    %2624 = vmatprep.subr.bf16.mxu0 0
    %2625 = vmatpush1.bf16.msra.mxu0 %v2597
    %2626 = vmatprep.subr.bf16.mxu0 0
    %2627 = vmatpush1.bf16.msra.mxu0 %v2596
    %2628 = vmatprep.subr.bf16.mxu0 0
    %2629 = vmatpush2.bf16.msra.mxu0 0
    %2630 = vmatprep.subr.bf16.mxu0 0
    %2631 = vmatpush2.bf16.msra.mxu0 0
    %2632 = vmatprep.subr.bf16.mxu0 0
    %2633 = vmatpush2.bf16.msra.mxu0 0
    %2634 = vmatprep.subr.bf16.mxu0 0
    %2635 = vmatpush2.bf16.msra.mxu0 0
    %2636 = vmatprep.subr.bf16.mxu0 0
    %2637 = vmatpush2.bf16.msra.mxu0 0
    %2638 = vmatprep.subr.bf16.mxu0 0
    %2639 = vmatpush2.bf16.msra.mxu0 0
    %2640 = vmatprep.subr.bf16.mxu0 0
    %2641 = vmatpush2.bf16.msra.mxu0 0
    %2642 = vmatprep.subr.bf16.mxu0 0
    %2643 = vmatpush2.bf16.msra.mxu0 0
    %2644 = vmatprep.mubr.bf16.mxu0 0
    %2645 = vmatmul.mubr.bf16.gmra.mxu0 %v2540
    %v2646 = vpop.f32.mrf.mxu0
    %v2647 = vadd.f32 %v2562, %v2646
    %v2648 = vpop.f32.mrf.mxu0
    %v2649 = vpop.f32.mrf.mxu0
    %v2650 = vadd.f32 %v2562, %v2649
    %v2651 = vpop.f32.mrf.mxu0
    %2652 = vdwg.mxu0
    %v2653 = vadd.f32 %v2468, %v2647
    %v2654 = vadd.f32 %v2469, %v2650
    %v2655 = vld [vmem:[%s15] sm:$0x1]
    %v2656 = vld [vmem:[%s16] sm:$0x1]
    %v2657 = vsel %vm142, %v2653, 0.0
    %2658 = vadd.xlane.f32.xlu0 %v2657
    %v2659 = vpop.xlane.xlu0 %2658
    %v2660 = vsel %vm142, %v2654, 0.0
    %2661 = vadd.xlane.f32.xlu0 %v2660
    %v2662 = vpop.xlane.xlu0 %2661
    %v2663 = vmul.f32 %v2659, %v2433
    %v2664 = vmul.f32 %v2662, %v2433
    %v2665 = vsub.f32 %v2653, %v2663
    %v2666 = vsub.f32 %v2654, %v2664
    %v2667 = vmul.f32 %v2665, %v2665
    %v2668 = vmul.f32 %v2666, %v2666
    %v2669 = vsel %vm142, %v2667, 0.0
    %2670 = vadd.xlane.f32.xlu0 %v2669
    %v2671 = vpop.xlane.xlu0 %2670
    %v2672 = vsel %vm142, %v2668, 0.0
    %2673 = vadd.xlane.f32.xlu0 %v2672
    %v2674 = vpop.xlane.xlu0 %2673
    %v2675 = vmul.f32 %v2671, %v2433
    %v2676 = vmul.f32 %v2674, %v2433
    %v2677 = vadd.f32 %v2675, 1e-05
    %v2678 = vadd.f32 %v2676, 1e-05
    %v2679 = vrsqrt.pop %v2677
    %v2680 = vrsqrt.pop %v2678
    %v2681 = vmul.f32 %v2665, %v2679
    %v2682 = vmul.f32 %v2666, %v2680
    %v2684 = vlaneseq
    %v2685 = vshrl.u32 %v2684, 7
    %v2686 = vsub.s32 0, %v2685
    %v2687 = vrot.slane %v2655, %v2686
    %v2689 = vmul.f32 %v2681, %v2687
    %v2690 = vmul.f32 %v2682, %v2687
    %v2692 = vlaneseq
    %v2693 = vshrl.u32 %v2692, 7
    %v2694 = vsub.s32 0, %v2693
    %v2695 = vrot.slane %v2656, %v2694
    %v2697 = vadd.f32 %v2689, %v2695
    %v2698 = vadd.f32 %v2690, %v2695
    %v2699 = vpack.c.bf16 %v2698, %v2697
    %v2701 = vunpack.c.l.b16 %v2699
    %v2702 = vunpack.c.h.b16 %v2699
    %v2703 = vpack.c.b16 %v2701, %v2701
    %v2704 = vpack.c.b16 %v2702, %v2702
    %vm2707 = vcmask 257024
    %2708 = vst.msk [vmem:[#allocation11] sm:$0xf] %vm2707, %v2703
    %2709 = vst.msk [vmem:[#allocation11 + $0x4] sm:$0xf] %vm2707, %v2704
    // Predicated region
    $region90: #{tpu_custom_call.1} parent=1 // pred_check
      _
    $region91: #{tpu_custom_call.1} parent=1 // pred_check_branch
      %2711 = sbr.rel (0) target = $region93
    $region92: #{tpu_custom_call.1} parent=1 // pred_region
      %s2713 = ssub.s32 128, 128
      %2714 = vsyncadd [#allocation4], %s2713
      %s2715 = sshll.u32 [#allocation11], 4
      %s2716 = int_to_ptr.vmem [resolvable:$true] %s2715
      %2721 = dma.vmem_to_hbm [thread:$0]  %s2716, 128, %s17, [#allocation4], 64, 64, 4
    $region93: #{tpu_custom_call.1} parent=1 // pred_fallthru
      _
    // Predicated region
    $region94: #{tpu_custom_call.1} parent=1 // pred_check
      _
    $region95: #{tpu_custom_call.1} parent=1 // pred_check_branch
      %2723 = sbr.rel (0) target = $region97
    $region96: #{tpu_custom_call.1} parent=1 // pred_region
      %2724 = dma.done [#allocation4], 128
    $region97: #{tpu_custom_call.1} parent=1 // pred_fallthru
      _
    %2725 = vsyncpa [#allocation3], 1
    %2726 = vsyncpa [#allocation6], 1
    %2727 = vsyncpa [#allocation9], 1
    %2728 = vsyncpa [#allocation4], 1

</llo_original>
